<compile_context>
chip_gen: v6e
topology: v6e:2x2x1
jax: 0.10.0
libtpu: 0.0.40
codegen_flags: <defaults>
</compile_context>

<pallas_src>
import jax
import jax.numpy as jnp
import numpy as np
from jax import lax
from jax.experimental import pallas as pl
from jax.experimental.pallas import tpu as pltpu


_VMEM_TILE_BUDGET = 16 * 1024 * 1024   # double-buffered tile working-set target
_VMEM_LIMIT = 32 * 1024 * 1024         # scoped VMEM limit (safe on v5e/v6e/v7x)
_ACC_BUDGET = 128 * 1024               # keep fori accumulators ~vreg-file sized


# ---------------------------------------------------------------------------
# Kernel 1: complex spectral mixing  out[b,o,m] = sum_i x[b,i,m] * w[i,o,m]
#   xr/xi: (Cin, B, Mt)    wr/wi: (Cin, Ct, Mt)    out: (B, Ct, Mt)
# Accumulate over Cin with VPU mult-adds; only one (B, Ct, Mt) accumulator pair
# is live, sized to stay register-resident.
# ---------------------------------------------------------------------------
def _spectral_mix_kernel(xr_ref, xi_ref, wr_ref, wi_ref, or_ref, oi_ref):
    cin, b, mt = xr_ref.shape
    ct = wr_ref.shape[1]

    def body(i, carry):
        acc_r, acc_i = carry
        xr_i = xr_ref[i][:, None, :]          # (B, 1, Mt)
        xi_i = xi_ref[i][:, None, :]
        wr_i = wr_ref[i][None, :, :]          # (1, Ct, Mt)
        wi_i = wi_ref[i][None, :, :]
        acc_r = acc_r + (xr_i * wr_i - xi_i * wi_i)
        acc_i = acc_i + (xr_i * wi_i + xi_i * wr_i)
        return acc_r, acc_i

    # partial unroll: full only for small Cin, otherwise 8/4/2 to keep LLO
    # visibility without exploding vreg live ranges.
    if cin <= 8:
        unroll = cin
    elif cin % 8 == 0:
        unroll = 8
    elif cin % 4 == 0:
        unroll = 4
    elif cin % 2 == 0:
        unroll = 2
    else:
        unroll = 1

    zero = jnp.zeros((b, ct, mt), jnp.float32)
    acc_r, acc_i = lax.fori_loop(0, cin, body, (zero, zero), unroll=unroll)
    or_ref[...] = acc_r
    oi_ref[...] = acc_i


def spectral_mix(xr, xi, wr, wi):
    cin, b, mp = xr.shape
    cout = wr.shape[1]

    # Mode-axis tile (lane dense): largest multiple of 128 dividing the padded
    # mode axis whose double-buffered working set (assuming full Cout) fits the
    # VMEM budget.
    per_col = 2 * (cin * b + cin * cout + b * cout) * 4 * 2
    mt = 128
    for t in (1024, 512, 256, 128):
        if mp % t == 0 and t * per_col <= _VMEM_TILE_BUDGET:
            mt = t
            break

    # Cout tile: keep the two (B, Ct, Mt) f32 accumulators within ~128 KiB so
    # the fori_loop carry stays register-resident; Ct must be sublane-aligned
    # (multiple of 8) or the full Cout.
    cap = max(1, _ACC_BUDGET // (2 * 4 * b * mt))
    divs = [d for d in range(1, cout + 1) if cout % d == 0]
    cands = [d for d in divs if d == cout or d % 8 == 0]
    fit_c = [d for d in cands if d <= cap]
    ct = max(fit_c) if fit_c else min(cands)
    # prefer >= 2 total grid steps (megacore sharding / DMA pipelining) when a
    # valid smaller Cout tile exists
    if (cout // ct) * (mp // mt) < 2:
        smaller = [d for d in cands if d < ct]
        if smaller:
            ct = max(smaller)

    spec_x = pl.BlockSpec((cin, b, mt), lambda co, m: (0, 0, m))
    spec_w = pl.BlockSpec((cin, ct, mt), lambda co, m: (0, co, m))
    spec_o = pl.BlockSpec((b, ct, mt), lambda co, m: (0, co, m))
    return pl.pallas_call(
        _spectral_mix_kernel,
        out_shape=(jax.ShapeDtypeStruct((b, cout, mp), jnp.float32),
                   jax.ShapeDtypeStruct((b, cout, mp), jnp.float32)),
        grid=(cout // ct, mp // mt),
        in_specs=[spec_x, spec_x, spec_w, spec_w],
        out_specs=(spec_o, spec_o),
        compiler_params=pltpu.CompilerParams(
            dimension_semantics=("parallel", "parallel"),
            vmem_limit_bytes=_VMEM_LIMIT),
    )(xr, xi, wr, wi)


# ---------------------------------------------------------------------------
# Kernel 2: 1x1 conv ("bias" path) + residual add, channels-on-sublanes.
#   out[b, o, n] = sum_i w[o, i] * x[b, i, n] + bias[o] + x1[b, o, n]
# Batch is folded into the block; the grid only walks the spatial axis.
# ---------------------------------------------------------------------------
def _pointwise_add_kernel(x_ref, w_ref, b_ref, x1_ref, o_ref):
    bsz = x_ref.shape[0]
    w = w_ref[...]                       # (Cout, Cin)
    bias = b_ref[...]                    # (Cout, 1)

    def body(bi, carry):
        y = jnp.dot(w, x_ref[bi], preferred_element_type=jnp.float32)  # (Cout, T)
        o_ref[bi] = y + bias + x1_ref[bi]        # single fused lane-dense store
        return carry

    lax.fori_loop(0, bsz, body, 0, unroll=True if bsz <= 8 else 2)


def pointwise_conv_add(x_bcn, w, b2d, x1_bcn):
    bsz, cin, n = x_bcn.shape
    cout = w.shape[0]

    # bytes per spatial column per grid step (x, x1, out), double-buffered
    per_col = (bsz * cin + 2 * bsz * cout) * 4 * 2
    ladder = (8192, 4096, 2048, 1024, 512, 256, 128)
    fit = [t for t in ladder if t * per_col <= _VMEM_TILE_BUDGET] or [128]
    tile_n = next((t for t in fit if n % t == 0), None)
    pad = 0
    if tile_n is None:
        tile_n = fit[0]                  # largest fitting tile (>= 512 typical)
        pad = (-n) % tile_n
        x_bcn = jnp.pad(x_bcn, ((0, 0), (0, 0), (0, pad)))
        x1_bcn = jnp.pad(x1_bcn, ((0, 0), (0, 0), (0, pad)))
    n_p = n + pad

    out = pl.pallas_call(
        _pointwise_add_kernel,
        out_shape=jax.ShapeDtypeStruct((bsz, cout, n_p), jnp.float32),
        grid=(n_p // tile_n,),
        in_specs=[
            pl.BlockSpec((bsz, cin, tile_n), lambda ni: (0, 0, ni)),
            pl.BlockSpec((cout, cin), lambda ni: (0, 0)),
            pl.BlockSpec((cout, 1), lambda ni: (0, 0)),
            pl.BlockSpec((bsz, cout, tile_n), lambda ni: (0, 0, ni)),
        ],
        out_specs=pl.BlockSpec((bsz, cout, tile_n), lambda ni: (0, 0, ni)),
        input_output_aliases={3: 0},     # reuse the x1 (residual) HBM buffer
        compiler_params=pltpu.CompilerParams(
            dimension_semantics=("parallel",),
            vmem_limit_bytes=_VMEM_LIMIT),
    )(x_bcn, w, b2d, x1_bcn)
    return out[..., :n] if pad else out


# ---------------------------------------------------------------------------
# One-time parameter re-layout (hoisted out of the per-call forward).
# PyTorch SpectralConv2d weights are (in, out, m1, m2) complex; the 1x1 conv is
# nn.Conv2d(width, width, 1): weight (Cout, Cin), bias (Cout,).
# ---------------------------------------------------------------------------
def prepare_fno2d_params(params, modes1, modes2):
    cin, cout = params["w1r"].shape[0], params["w1r"].shape[1]
    M = modes1 * modes2
    M2 = 2 * M
    Mp = ((M2 + 127) // 128) * 128       # lane-dense padded mode axis
    wr = jnp.concatenate([params["w1r"].reshape(cin, cout, M),
                          params["w2r"].reshape(cin, cout, M)], axis=-1)
    wi = jnp.concatenate([params["w1i"].reshape(cin, cout, M),
                          params["w2i"].reshape(cin, cout, M)], axis=-1)
    if Mp != M2:
        padc = ((0, 0), (0, 0), (0, Mp - M2))
        wr = jnp.pad(wr, padc)
        wi = jnp.pad(wi, padc)
    return {
        "wr": wr.astype(jnp.float32),
        "wi": wi.astype(jnp.float32),
        "w_pw": params["w_pw"].astype(jnp.float32),
        "b_pw": params["b_pw"].reshape(-1, 1).astype(jnp.float32),
    }


# ---------------------------------------------------------------------------
# FNO2dLayer forward:  x1 = SpectralConv2d(x) ; x2 = Conv2d_1x1(x) ; x1 + x2
# ---------------------------------------------------------------------------
def fno2d_layer_forward(x, prep, modes1, modes2):
    B, Cin, H, W = x.shape
    Cout = prep["w_pw"].shape[0]
    M = modes1 * modes2
    M2 = 2 * M
    Mp = prep["wr"].shape[-1]
    Wh = W // 2 + 1

    # ---- spectral conv path -------------------------------------------------
    x_ft = jnp.fft.rfft2(x)                                     # (B,Cin,H,Wh) c64
    top = x_ft[:, :, :modes1, :modes2].reshape(B, Cin, M)       # low +freq modes
    bot = x_ft[:, :, H - modes1:, :modes2].reshape(B, Cin, M)   # low -freq modes
    xf = jnp.concatenate([top, bot], axis=-1)                   # (B, Cin, 2M) tiny
    # channels-leading layout for the Pallas kernel (tiny tensors, cheap)
    xr = jnp.transpose(jnp.real(xf), (1, 0, 2)).astype(jnp.float32)  # (Cin,B,2M)
    xi = jnp.transpose(jnp.imag(xf), (1, 0, 2)).astype(jnp.float32)
    if Mp != M2:
        padc = ((0, 0), (0, 0), (0, Mp - M2))
        xr = jnp.pad(xr, padc)
        xi = jnp.pad(xi, padc)

    out_r, out_i = spectral_mix(xr, xi, prep["wr"], prep["wi"])  # (B, Cout, Mp)
    out_c = out_r[..., :M2] + 1j * out_i[..., :M2]               # (B, Cout, 2M)

    top_o = out_c[..., :M].reshape(B, Cout, modes1, modes2)
    bot_o = out_c[..., M:].reshape(B, Cout, modes1, modes2)
    if H >= 2 * modes1:
        # assemble the rfft2 frequency grid via pad+concat (no zeros+scatter)
        top_p = jnp.pad(top_o, ((0, 0), (0, 0), (0, 0), (0, Wh - modes2)))
        bot_p = jnp.pad(bot_o, ((0, 0), (0, 0), (0, 0), (0, Wh - modes2)))
        mid = jnp.zeros((B, Cout, H - 2 * modes1, Wh), out_c.dtype)
        out_ft = jnp.concatenate([top_p, mid, bot_p], axis=2)   # (B,Cout,H,Wh)
    else:
        # small-grid fallback: mirror the reference's overlapping scatter writes
        out_ft = jnp.zeros((B, Cout, H, Wh), out_c.dtype)
        out_ft = out_ft.at[:, :, :modes1, :modes2].set(top_o)
        out_ft = out_ft.at[:, :, H - modes1:, :modes2].set(bot_o)
    x1 = jnp.fft.irfft2(out_ft, s=(H, W)).astype(jnp.float32)   # (B, Cout, H, W)

    # ---- 1x1 conv ("bias") path + residual add, fused in Pallas -------------
    # reshape only (no transposes): channels stay on sublanes, H*W on lanes.
    x_bcn = x.reshape(B, Cin, H * W)
    x1_bcn = x1.reshape(B, Cout, H * W)
    out_bcn = pointwise_conv_add(x_bcn, prep["w_pw"], prep["b_pw"], x1_bcn)
    return out_bcn.reshape(B, Cout, H, W)


# ---------------------------------------------------------------------------
# Pure-JAX reference (mirrors the PyTorch forward exactly) for verification
# ---------------------------------------------------------------------------
def reference_forward(x, params, modes1, modes2):
    B, Cin, H, W = x.shape
    Cout = params["w_pw"].shape[0]
    w1 = params["w1r"] + 1j * params["w1i"]
    w2 = params["w2r"] + 1j * params["w2i"]
    x_ft = jnp.fft.rfft2(x)
    out_ft = jnp.zeros((B, Cout, H, W // 2 + 1), dtype=jnp.complex64)
    out_ft = out_ft.at[:, :, :modes1, :modes2].set(
        jnp.einsum("bixy,ioxy->boxy", x_ft[:, :, :modes1, :modes2], w1))
    out_ft = out_ft.at[:, :, H - modes1:, :modes2].set(
        jnp.einsum("bixy,ioxy->boxy", x_ft[:, :, H - modes1:, :modes2], w2))
    x1 = jnp.fft.irfft2(out_ft, s=(H, W))
    x2 = (jnp.einsum("oi,bihw->bohw", params["w_pw"], x)
          + params["b_pw"][None, :, None, None])
    return (x1 + x2).astype(jnp.float32)


if __name__ == "__main__":
    key = jax.random.PRNGKey(0)
    B, C, H, W = 2, 8, 16, 16          # batch, width (channels), spatial
    modes1 = modes2 = 4                # kept Fourier modes
    k = jax.random.split(key, 7)

    scale = 1.0 / (C * C)
    params = {
        # SpectralConv2d weights (in, out, m1, m2) complex -> real/imag pairs
        "w1r": scale * jax.random.uniform(k[0], (C, C, modes1, modes2), jnp.float32),
        "w1i": scale * jax.random.uniform(k[1], (C, C, modes1, modes2), jnp.float32),
        "w2r": scale * jax.random.uniform(k[2], (C, C, modes1, modes2), jnp.float32),
        "w2i": scale * jax.random.uniform(k[3], (C, C, modes1, modes2), jnp.float32),
        # nn.Conv2d(width, width, 1) weight (Cout, Cin) and bias (Cout,)
        "w_pw": 0.1 * jax.random.normal(k[4], (C, C), jnp.float32),
        "b_pw": 0.1 * jax.random.normal(k[5], (C,), jnp.float32),
    }
    x = jax.random.normal(k[6], (B, C, H, W), jnp.float32)

    # one-time weight re-layout (hoisted out of the per-call forward)
    prep = prepare_fno2d_params(params, modes1, modes2)
    prep = jax.tree_util.tree_map(jax.block_until_ready, prep)

    fwd = jax.jit(lambda x: fno2d_layer_forward(x, prep, modes1, modes2))
    out = fwd(x)
    jax.block_until_ready(out)

    ref = reference_forward(x, params, modes1, modes2)
    np.testing.assert_allclose(np.asarray(out), np.asarray(ref),
                               rtol=1e-4, atol=1e-4)
    print("KERNEL_OK")
</pallas_src>

<mosaic_0001>
module attributes {stable_mosaic.version = 11 : i64} {
  func.func @_spectral_mix_kernel(%arg0: i32, %arg1: i32, %arg2: memref<8x2x128xf32, #tpu.memory_space<vmem>>, %arg3: memref<8x2x128xf32, #tpu.memory_space<vmem>>, %arg4: memref<8x8x128xf32, #tpu.memory_space<vmem>>, %arg5: memref<8x8x128xf32, #tpu.memory_space<vmem>>, %arg6: memref<2x8x128xf32, #tpu.memory_space<vmem>>, %arg7: memref<2x8x128xf32, #tpu.memory_space<vmem>>) attributes {dimension_semantics = [#tpu.dimension_semantics<parallel>, #tpu.dimension_semantics<parallel>], iteration_bounds = array<i64: 1, 1>, scalar_prefetch = 0 : i64, scratch_operands = 0 : i64, tpu.core_type = #tpu.core_type<tc>, window_params = [{transform_indices = @transform_0, window_bounds = array<i64: 8, 2, 128>}, {transform_indices = @transform_1, window_bounds = array<i64: 8, 2, 128>}, {transform_indices = @transform_2, window_bounds = array<i64: 8, 8, 128>}, {transform_indices = @transform_3, window_bounds = array<i64: 8, 8, 128>}, {transform_indices = @transform_4, window_bounds = array<i64: 2, 8, 128>}, {transform_indices = @transform_5, window_bounds = array<i64: 2, 8, 128>}]} {
    %cst = arith.constant 0.000000e+00 : f32
    %0 = vector.broadcast %cst : f32 to vector<2x8x128xf32>
    %c0_i32 = arith.constant 0 : i32
    %1 = arith.index_cast %c0_i32 : i32 to index
    %c0 = arith.constant 0 : index
    %c0_0 = arith.constant 0 : index
    %2 = vector.load %arg2[%1, %c0, %c0_0] : memref<8x2x128xf32, #tpu.memory_space<vmem>>, vector<1x2x128xf32>
    %3 = vector.shape_cast %2 : vector<1x2x128xf32> to vector<2x128xf32>
    %4 = vector.shape_cast %3 : vector<2x128xf32> to vector<2x1x128xf32>
    %5 = arith.index_cast %c0_i32 : i32 to index
    %c0_1 = arith.constant 0 : index
    %c0_2 = arith.constant 0 : index
    %6 = vector.load %arg3[%5, %c0_1, %c0_2] : memref<8x2x128xf32, #tpu.memory_space<vmem>>, vector<1x2x128xf32>
    %7 = vector.shape_cast %6 : vector<1x2x128xf32> to vector<2x128xf32>
    %8 = vector.shape_cast %7 : vector<2x128xf32> to vector<2x1x128xf32>
    %9 = arith.index_cast %c0_i32 : i32 to index
    %c0_3 = arith.constant 0 : index
    %c0_4 = arith.constant 0 : index
    %10 = vector.load %arg4[%9, %c0_3, %c0_4] : memref<8x8x128xf32, #tpu.memory_space<vmem>>, vector<1x8x128xf32>
    %11 = vector.shape_cast %10 : vector<1x8x128xf32> to vector<8x128xf32>
    %12 = vector.shape_cast %11 : vector<8x128xf32> to vector<1x8x128xf32>
    %13 = arith.index_cast %c0_i32 : i32 to index
    %c0_5 = arith.constant 0 : index
    %c0_6 = arith.constant 0 : index
    %14 = vector.load %arg5[%13, %c0_5, %c0_6] : memref<8x8x128xf32, #tpu.memory_space<vmem>>, vector<1x8x128xf32>
    %15 = vector.shape_cast %14 : vector<1x8x128xf32> to vector<8x128xf32>
    %16 = vector.shape_cast %15 : vector<8x128xf32> to vector<1x8x128xf32>
    %17 = vector.broadcast %4 : vector<2x1x128xf32> to vector<2x8x128xf32>
    %18 = vector.broadcast %12 : vector<1x8x128xf32> to vector<2x8x128xf32>
    %19 = arith.mulf %17, %18 : vector<2x8x128xf32>
    %20 = vector.broadcast %8 : vector<2x1x128xf32> to vector<2x8x128xf32>
    %21 = vector.broadcast %16 : vector<1x8x128xf32> to vector<2x8x128xf32>
    %22 = arith.mulf %20, %21 : vector<2x8x128xf32>
    %23 = arith.subf %19, %22 : vector<2x8x128xf32>
    %24 = arith.addf %0, %23 : vector<2x8x128xf32>
    %25 = vector.broadcast %4 : vector<2x1x128xf32> to vector<2x8x128xf32>
    %26 = vector.broadcast %16 : vector<1x8x128xf32> to vector<2x8x128xf32>
    %27 = arith.mulf %25, %26 : vector<2x8x128xf32>
    %28 = vector.broadcast %8 : vector<2x1x128xf32> to vector<2x8x128xf32>
    %29 = vector.broadcast %12 : vector<1x8x128xf32> to vector<2x8x128xf32>
    %30 = arith.mulf %28, %29 : vector<2x8x128xf32>
    %31 = arith.addf %27, %30 : vector<2x8x128xf32>
    %32 = arith.addf %0, %31 : vector<2x8x128xf32>
    %c1_i32 = arith.constant 1 : i32
    %33 = arith.index_cast %c1_i32 : i32 to index
    %c0_7 = arith.constant 0 : index
    %c0_8 = arith.constant 0 : index
    %34 = vector.load %arg2[%33, %c0_7, %c0_8] : memref<8x2x128xf32, #tpu.memory_space<vmem>>, vector<1x2x128xf32>
    %35 = vector.shape_cast %34 : vector<1x2x128xf32> to vector<2x128xf32>
    %36 = vector.shape_cast %35 : vector<2x128xf32> to vector<2x1x128xf32>
    %37 = arith.index_cast %c1_i32 : i32 to index
    %c0_9 = arith.constant 0 : index
    %c0_10 = arith.constant 0 : index
    %38 = vector.load %arg3[%37, %c0_9, %c0_10] : memref<8x2x128xf32, #tpu.memory_space<vmem>>, vector<1x2x128xf32>
    %39 = vector.shape_cast %38 : vector<1x2x128xf32> to vector<2x128xf32>
    %40 = vector.shape_cast %39 : vector<2x128xf32> to vector<2x1x128xf32>
    %41 = arith.index_cast %c1_i32 : i32 to index
    %c0_11 = arith.constant 0 : index
    %c0_12 = arith.constant 0 : index
    %42 = vector.load %arg4[%41, %c0_11, %c0_12] : memref<8x8x128xf32, #tpu.memory_space<vmem>>, vector<1x8x128xf32>
    %43 = vector.shape_cast %42 : vector<1x8x128xf32> to vector<8x128xf32>
    %44 = vector.shape_cast %43 : vector<8x128xf32> to vector<1x8x128xf32>
    %45 = arith.index_cast %c1_i32 : i32 to index
    %c0_13 = arith.constant 0 : index
    %c0_14 = arith.constant 0 : index
    %46 = vector.load %arg5[%45, %c0_13, %c0_14] : memref<8x8x128xf32, #tpu.memory_space<vmem>>, vector<1x8x128xf32>
    %47 = vector.shape_cast %46 : vector<1x8x128xf32> to vector<8x128xf32>
    %48 = vector.shape_cast %47 : vector<8x128xf32> to vector<1x8x128xf32>
    %49 = vector.broadcast %36 : vector<2x1x128xf32> to vector<2x8x128xf32>
    %50 = vector.broadcast %44 : vector<1x8x128xf32> to vector<2x8x128xf32>
    %51 = arith.mulf %49, %50 : vector<2x8x128xf32>
    %52 = vector.broadcast %40 : vector<2x1x128xf32> to vector<2x8x128xf32>
    %53 = vector.broadcast %48 : vector<1x8x128xf32> to vector<2x8x128xf32>
    %54 = arith.mulf %52, %53 : vector<2x8x128xf32>
    %55 = arith.subf %51, %54 : vector<2x8x128xf32>
    %56 = arith.addf %24, %55 : vector<2x8x128xf32>
    %57 = vector.broadcast %36 : vector<2x1x128xf32> to vector<2x8x128xf32>
    %58 = vector.broadcast %48 : vector<1x8x128xf32> to vector<2x8x128xf32>
    %59 = arith.mulf %57, %58 : vector<2x8x128xf32>
    %60 = vector.broadcast %40 : vector<2x1x128xf32> to vector<2x8x128xf32>
    %61 = vector.broadcast %44 : vector<1x8x128xf32> to vector<2x8x128xf32>
    %62 = arith.mulf %60, %61 : vector<2x8x128xf32>
    %63 = arith.addf %59, %62 : vector<2x8x128xf32>
    %64 = arith.addf %32, %63 : vector<2x8x128xf32>
    %c2_i32 = arith.constant 2 : i32
    %65 = arith.index_cast %c2_i32 : i32 to index
    %c0_15 = arith.constant 0 : index
    %c0_16 = arith.constant 0 : index
    %66 = vector.load %arg2[%65, %c0_15, %c0_16] : memref<8x2x128xf32, #tpu.memory_space<vmem>>, vector<1x2x128xf32>
    %67 = vector.shape_cast %66 : vector<1x2x128xf32> to vector<2x128xf32>
    %68 = vector.shape_cast %67 : vector<2x128xf32> to vector<2x1x128xf32>
    %69 = arith.index_cast %c2_i32 : i32 to index
    %c0_17 = arith.constant 0 : index
    %c0_18 = arith.constant 0 : index
    %70 = vector.load %arg3[%69, %c0_17, %c0_18] : memref<8x2x128xf32, #tpu.memory_space<vmem>>, vector<1x2x128xf32>
    %71 = vector.shape_cast %70 : vector<1x2x128xf32> to vector<2x128xf32>
    %72 = vector.shape_cast %71 : vector<2x128xf32> to vector<2x1x128xf32>
    %73 = arith.index_cast %c2_i32 : i32 to index
    %c0_19 = arith.constant 0 : index
    %c0_20 = arith.constant 0 : index
    %74 = vector.load %arg4[%73, %c0_19, %c0_20] : memref<8x8x128xf32, #tpu.memory_space<vmem>>, vector<1x8x128xf32>
    %75 = vector.shape_cast %74 : vector<1x8x128xf32> to vector<8x128xf32>
    %76 = vector.shape_cast %75 : vector<8x128xf32> to vector<1x8x128xf32>
    %77 = arith.index_cast %c2_i32 : i32 to index
    %c0_21 = arith.constant 0 : index
    %c0_22 = arith.constant 0 : index
    %78 = vector.load %arg5[%77, %c0_21, %c0_22] : memref<8x8x128xf32, #tpu.memory_space<vmem>>, vector<1x8x128xf32>
    %79 = vector.shape_cast %78 : vector<1x8x128xf32> to vector<8x128xf32>
    %80 = vector.shape_cast %79 : vector<8x128xf32> to vector<1x8x128xf32>
    %81 = vector.broadcast %68 : vector<2x1x128xf32> to vector<2x8x128xf32>
    %82 = vector.broadcast %76 : vector<1x8x128xf32> to vector<2x8x128xf32>
    %83 = arith.mulf %81, %82 : vector<2x8x128xf32>
    %84 = vector.broadcast %72 : vector<2x1x128xf32> to vector<2x8x128xf32>
    %85 = vector.broadcast %80 : vector<1x8x128xf32> to vector<2x8x128xf32>
    %86 = arith.mulf %84, %85 : vector<2x8x128xf32>
    %87 = arith.subf %83, %86 : vector<2x8x128xf32>
    %88 = arith.addf %56, %87 : vector<2x8x128xf32>
    %89 = vector.broadcast %68 : vector<2x1x128xf32> to vector<2x8x128xf32>
    %90 = vector.broadcast %80 : vector<1x8x128xf32> to vector<2x8x128xf32>
    %91 = arith.mulf %89, %90 : vector<2x8x128xf32>
    %92 = vector.broadcast %72 : vector<2x1x128xf32> to vector<2x8x128xf32>
    %93 = vector.broadcast %76 : vector<1x8x128xf32> to vector<2x8x128xf32>
    %94 = arith.mulf %92, %93 : vector<2x8x128xf32>
    %95 = arith.addf %91, %94 : vector<2x8x128xf32>
    %96 = arith.addf %64, %95 : vector<2x8x128xf32>
    %c3_i32 = arith.constant 3 : i32
    %97 = arith.index_cast %c3_i32 : i32 to index
    %c0_23 = arith.constant 0 : index
    %c0_24 = arith.constant 0 : index
    %98 = vector.load %arg2[%97, %c0_23, %c0_24] : memref<8x2x128xf32, #tpu.memory_space<vmem>>, vector<1x2x128xf32>
    %99 = vector.shape_cast %98 : vector<1x2x128xf32> to vector<2x128xf32>
    %100 = vector.shape_cast %99 : vector<2x128xf32> to vector<2x1x128xf32>
    %101 = arith.index_cast %c3_i32 : i32 to index
    %c0_25 = arith.constant 0 : index
    %c0_26 = arith.constant 0 : index
    %102 = vector.load %arg3[%101, %c0_25, %c0_26] : memref<8x2x128xf32, #tpu.memory_space<vmem>>, vector<1x2x128xf32>
    %103 = vector.shape_cast %102 : vector<1x2x128xf32> to vector<2x128xf32>
    %104 = vector.shape_cast %103 : vector<2x128xf32> to vector<2x1x128xf32>
    %105 = arith.index_cast %c3_i32 : i32 to index
    %c0_27 = arith.constant 0 : index
    %c0_28 = arith.constant 0 : index
    %106 = vector.load %arg4[%105, %c0_27, %c0_28] : memref<8x8x128xf32, #tpu.memory_space<vmem>>, vector<1x8x128xf32>
    %107 = vector.shape_cast %106 : vector<1x8x128xf32> to vector<8x128xf32>
    %108 = vector.shape_cast %107 : vector<8x128xf32> to vector<1x8x128xf32>
    %109 = arith.index_cast %c3_i32 : i32 to index
    %c0_29 = arith.constant 0 : index
    %c0_30 = arith.constant 0 : index
    %110 = vector.load %arg5[%109, %c0_29, %c0_30] : memref<8x8x128xf32, #tpu.memory_space<vmem>>, vector<1x8x128xf32>
    %111 = vector.shape_cast %110 : vector<1x8x128xf32> to vector<8x128xf32>
    %112 = vector.shape_cast %111 : vector<8x128xf32> to vector<1x8x128xf32>
    %113 = vector.broadcast %100 : vector<2x1x128xf32> to vector<2x8x128xf32>
    %114 = vector.broadcast %108 : vector<1x8x128xf32> to vector<2x8x128xf32>
    %115 = arith.mulf %113, %114 : vector<2x8x128xf32>
    %116 = vector.broadcast %104 : vector<2x1x128xf32> to vector<2x8x128xf32>
    %117 = vector.broadcast %112 : vector<1x8x128xf32> to vector<2x8x128xf32>
    %118 = arith.mulf %116, %117 : vector<2x8x128xf32>
    %119 = arith.subf %115, %118 : vector<2x8x128xf32>
    %120 = arith.addf %88, %119 : vector<2x8x128xf32>
    %121 = vector.broadcast %100 : vector<2x1x128xf32> to vector<2x8x128xf32>
    %122 = vector.broadcast %112 : vector<1x8x128xf32> to vector<2x8x128xf32>
    %123 = arith.mulf %121, %122 : vector<2x8x128xf32>
    %124 = vector.broadcast %104 : vector<2x1x128xf32> to vector<2x8x128xf32>
    %125 = vector.broadcast %108 : vector<1x8x128xf32> to vector<2x8x128xf32>
    %126 = arith.mulf %124, %125 : vector<2x8x128xf32>
    %127 = arith.addf %123, %126 : vector<2x8x128xf32>
    %128 = arith.addf %96, %127 : vector<2x8x128xf32>
    %c4_i32 = arith.constant 4 : i32
    %129 = arith.index_cast %c4_i32 : i32 to index
    %c0_31 = arith.constant 0 : index
    %c0_32 = arith.constant 0 : index
    %130 = vector.load %arg2[%129, %c0_31, %c0_32] : memref<8x2x128xf32, #tpu.memory_space<vmem>>, vector<1x2x128xf32>
    %131 = vector.shape_cast %130 : vector<1x2x128xf32> to vector<2x128xf32>
    %132 = vector.shape_cast %131 : vector<2x128xf32> to vector<2x1x128xf32>
    %133 = arith.index_cast %c4_i32 : i32 to index
    %c0_33 = arith.constant 0 : index
    %c0_34 = arith.constant 0 : index
    %134 = vector.load %arg3[%133, %c0_33, %c0_34] : memref<8x2x128xf32, #tpu.memory_space<vmem>>, vector<1x2x128xf32>
    %135 = vector.shape_cast %134 : vector<1x2x128xf32> to vector<2x128xf32>
    %136 = vector.shape_cast %135 : vector<2x128xf32> to vector<2x1x128xf32>
    %137 = arith.index_cast %c4_i32 : i32 to index
    %c0_35 = arith.constant 0 : index
    %c0_36 = arith.constant 0 : index
    %138 = vector.load %arg4[%137, %c0_35, %c0_36] : memref<8x8x128xf32, #tpu.memory_space<vmem>>, vector<1x8x128xf32>
    %139 = vector.shape_cast %138 : vector<1x8x128xf32> to vector<8x128xf32>
    %140 = vector.shape_cast %139 : vector<8x128xf32> to vector<1x8x128xf32>
    %141 = arith.index_cast %c4_i32 : i32 to index
    %c0_37 = arith.constant 0 : index
    %c0_38 = arith.constant 0 : index
    %142 = vector.load %arg5[%141, %c0_37, %c0_38] : memref<8x8x128xf32, #tpu.memory_space<vmem>>, vector<1x8x128xf32>
    %143 = vector.shape_cast %142 : vector<1x8x128xf32> to vector<8x128xf32>
    %144 = vector.shape_cast %143 : vector<8x128xf32> to vector<1x8x128xf32>
    %145 = vector.broadcast %132 : vector<2x1x128xf32> to vector<2x8x128xf32>
    %146 = vector.broadcast %140 : vector<1x8x128xf32> to vector<2x8x128xf32>
    %147 = arith.mulf %145, %146 : vector<2x8x128xf32>
    %148 = vector.broadcast %136 : vector<2x1x128xf32> to vector<2x8x128xf32>
    %149 = vector.broadcast %144 : vector<1x8x128xf32> to vector<2x8x128xf32>
    %150 = arith.mulf %148, %149 : vector<2x8x128xf32>
    %151 = arith.subf %147, %150 : vector<2x8x128xf32>
    %152 = arith.addf %120, %151 : vector<2x8x128xf32>
    %153 = vector.broadcast %132 : vector<2x1x128xf32> to vector<2x8x128xf32>
    %154 = vector.broadcast %144 : vector<1x8x128xf32> to vector<2x8x128xf32>
    %155 = arith.mulf %153, %154 : vector<2x8x128xf32>
    %156 = vector.broadcast %136 : vector<2x1x128xf32> to vector<2x8x128xf32>
    %157 = vector.broadcast %140 : vector<1x8x128xf32> to vector<2x8x128xf32>
    %158 = arith.mulf %156, %157 : vector<2x8x128xf32>
    %159 = arith.addf %155, %158 : vector<2x8x128xf32>
    %160 = arith.addf %128, %159 : vector<2x8x128xf32>
    %c5_i32 = arith.constant 5 : i32
    %161 = arith.index_cast %c5_i32 : i32 to index
    %c0_39 = arith.constant 0 : index
    %c0_40 = arith.constant 0 : index
    %162 = vector.load %arg2[%161, %c0_39, %c0_40] : memref<8x2x128xf32, #tpu.memory_space<vmem>>, vector<1x2x128xf32>
    %163 = vector.shape_cast %162 : vector<1x2x128xf32> to vector<2x128xf32>
    %164 = vector.shape_cast %163 : vector<2x128xf32> to vector<2x1x128xf32>
    %165 = arith.index_cast %c5_i32 : i32 to index
    %c0_41 = arith.constant 0 : index
    %c0_42 = arith.constant 0 : index
    %166 = vector.load %arg3[%165, %c0_41, %c0_42] : memref<8x2x128xf32, #tpu.memory_space<vmem>>, vector<1x2x128xf32>
    %167 = vector.shape_cast %166 : vector<1x2x128xf32> to vector<2x128xf32>
    %168 = vector.shape_cast %167 : vector<2x128xf32> to vector<2x1x128xf32>
    %169 = arith.index_cast %c5_i32 : i32 to index
    %c0_43 = arith.constant 0 : index
    %c0_44 = arith.constant 0 : index
    %170 = vector.load %arg4[%169, %c0_43, %c0_44] : memref<8x8x128xf32, #tpu.memory_space<vmem>>, vector<1x8x128xf32>
    %171 = vector.shape_cast %170 : vector<1x8x128xf32> to vector<8x128xf32>
    %172 = vector.shape_cast %171 : vector<8x128xf32> to vector<1x8x128xf32>
    %173 = arith.index_cast %c5_i32 : i32 to index
    %c0_45 = arith.constant 0 : index
    %c0_46 = arith.constant 0 : index
    %174 = vector.load %arg5[%173, %c0_45, %c0_46] : memref<8x8x128xf32, #tpu.memory_space<vmem>>, vector<1x8x128xf32>
    %175 = vector.shape_cast %174 : vector<1x8x128xf32> to vector<8x128xf32>
    %176 = vector.shape_cast %175 : vector<8x128xf32> to vector<1x8x128xf32>
    %177 = vector.broadcast %164 : vector<2x1x128xf32> to vector<2x8x128xf32>
    %178 = vector.broadcast %172 : vector<1x8x128xf32> to vector<2x8x128xf32>
    %179 = arith.mulf %177, %178 : vector<2x8x128xf32>
    %180 = vector.broadcast %168 : vector<2x1x128xf32> to vector<2x8x128xf32>
    %181 = vector.broadcast %176 : vector<1x8x128xf32> to vector<2x8x128xf32>
    %182 = arith.mulf %180, %181 : vector<2x8x128xf32>
    %183 = arith.subf %179, %182 : vector<2x8x128xf32>
    %184 = arith.addf %152, %183 : vector<2x8x128xf32>
    %185 = vector.broadcast %164 : vector<2x1x128xf32> to vector<2x8x128xf32>
    %186 = vector.broadcast %176 : vector<1x8x128xf32> to vector<2x8x128xf32>
    %187 = arith.mulf %185, %186 : vector<2x8x128xf32>
    %188 = vector.broadcast %168 : vector<2x1x128xf32> to vector<2x8x128xf32>
    %189 = vector.broadcast %172 : vector<1x8x128xf32> to vector<2x8x128xf32>
    %190 = arith.mulf %188, %189 : vector<2x8x128xf32>
    %191 = arith.addf %187, %190 : vector<2x8x128xf32>
    %192 = arith.addf %160, %191 : vector<2x8x128xf32>
    %c6_i32 = arith.constant 6 : i32
    %193 = arith.index_cast %c6_i32 : i32 to index
    %c0_47 = arith.constant 0 : index
    %c0_48 = arith.constant 0 : index
    %194 = vector.load %arg2[%193, %c0_47, %c0_48] : memref<8x2x128xf32, #tpu.memory_space<vmem>>, vector<1x2x128xf32>
    %195 = vector.shape_cast %194 : vector<1x2x128xf32> to vector<2x128xf32>
    %196 = vector.shape_cast %195 : vector<2x128xf32> to vector<2x1x128xf32>
    %197 = arith.index_cast %c6_i32 : i32 to index
    %c0_49 = arith.constant 0 : index
    %c0_50 = arith.constant 0 : index
    %198 = vector.load %arg3[%197, %c0_49, %c0_50] : memref<8x2x128xf32, #tpu.memory_space<vmem>>, vector<1x2x128xf32>
    %199 = vector.shape_cast %198 : vector<1x2x128xf32> to vector<2x128xf32>
    %200 = vector.shape_cast %199 : vector<2x128xf32> to vector<2x1x128xf32>
    %201 = arith.index_cast %c6_i32 : i32 to index
    %c0_51 = arith.constant 0 : index
    %c0_52 = arith.constant 0 : index
    %202 = vector.load %arg4[%201, %c0_51, %c0_52] : memref<8x8x128xf32, #tpu.memory_space<vmem>>, vector<1x8x128xf32>
    %203 = vector.shape_cast %202 : vector<1x8x128xf32> to vector<8x128xf32>
    %204 = vector.shape_cast %203 : vector<8x128xf32> to vector<1x8x128xf32>
    %205 = arith.index_cast %c6_i32 : i32 to index
    %c0_53 = arith.constant 0 : index
    %c0_54 = arith.constant 0 : index
    %206 = vector.load %arg5[%205, %c0_53, %c0_54] : memref<8x8x128xf32, #tpu.memory_space<vmem>>, vector<1x8x128xf32>
    %207 = vector.shape_cast %206 : vector<1x8x128xf32> to vector<8x128xf32>
    %208 = vector.shape_cast %207 : vector<8x128xf32> to vector<1x8x128xf32>
    %209 = vector.broadcast %196 : vector<2x1x128xf32> to vector<2x8x128xf32>
    %210 = vector.broadcast %204 : vector<1x8x128xf32> to vector<2x8x128xf32>
    %211 = arith.mulf %209, %210 : vector<2x8x128xf32>
    %212 = vector.broadcast %200 : vector<2x1x128xf32> to vector<2x8x128xf32>
    %213 = vector.broadcast %208 : vector<1x8x128xf32> to vector<2x8x128xf32>
    %214 = arith.mulf %212, %213 : vector<2x8x128xf32>
    %215 = arith.subf %211, %214 : vector<2x8x128xf32>
    %216 = arith.addf %184, %215 : vector<2x8x128xf32>
    %217 = vector.broadcast %196 : vector<2x1x128xf32> to vector<2x8x128xf32>
    %218 = vector.broadcast %208 : vector<1x8x128xf32> to vector<2x8x128xf32>
    %219 = arith.mulf %217, %218 : vector<2x8x128xf32>
    %220 = vector.broadcast %200 : vector<2x1x128xf32> to vector<2x8x128xf32>
    %221 = vector.broadcast %204 : vector<1x8x128xf32> to vector<2x8x128xf32>
    %222 = arith.mulf %220, %221 : vector<2x8x128xf32>
    %223 = arith.addf %219, %222 : vector<2x8x128xf32>
    %224 = arith.addf %192, %223 : vector<2x8x128xf32>
    %c7_i32 = arith.constant 7 : i32
    %225 = arith.index_cast %c7_i32 : i32 to index
    %c0_55 = arith.constant 0 : index
    %c0_56 = arith.constant 0 : index
    %226 = vector.load %arg2[%225, %c0_55, %c0_56] : memref<8x2x128xf32, #tpu.memory_space<vmem>>, vector<1x2x128xf32>
    %227 = vector.shape_cast %226 : vector<1x2x128xf32> to vector<2x128xf32>
    %228 = vector.shape_cast %227 : vector<2x128xf32> to vector<2x1x128xf32>
    %229 = arith.index_cast %c7_i32 : i32 to index
    %c0_57 = arith.constant 0 : index
    %c0_58 = arith.constant 0 : index
    %230 = vector.load %arg3[%229, %c0_57, %c0_58] : memref<8x2x128xf32, #tpu.memory_space<vmem>>, vector<1x2x128xf32>
    %231 = vector.shape_cast %230 : vector<1x2x128xf32> to vector<2x128xf32>
    %232 = vector.shape_cast %231 : vector<2x128xf32> to vector<2x1x128xf32>
    %233 = arith.index_cast %c7_i32 : i32 to index
    %c0_59 = arith.constant 0 : index
    %c0_60 = arith.constant 0 : index
    %234 = vector.load %arg4[%233, %c0_59, %c0_60] : memref<8x8x128xf32, #tpu.memory_space<vmem>>, vector<1x8x128xf32>
    %235 = vector.shape_cast %234 : vector<1x8x128xf32> to vector<8x128xf32>
    %236 = vector.shape_cast %235 : vector<8x128xf32> to vector<1x8x128xf32>
    %237 = arith.index_cast %c7_i32 : i32 to index
    %c0_61 = arith.constant 0 : index
    %c0_62 = arith.constant 0 : index
    %238 = vector.load %arg5[%237, %c0_61, %c0_62] : memref<8x8x128xf32, #tpu.memory_space<vmem>>, vector<1x8x128xf32>
    %239 = vector.shape_cast %238 : vector<1x8x128xf32> to vector<8x128xf32>
    %240 = vector.shape_cast %239 : vector<8x128xf32> to vector<1x8x128xf32>
    %241 = vector.broadcast %228 : vector<2x1x128xf32> to vector<2x8x128xf32>
    %242 = vector.broadcast %236 : vector<1x8x128xf32> to vector<2x8x128xf32>
    %243 = arith.mulf %241, %242 : vector<2x8x128xf32>
    %244 = vector.broadcast %232 : vector<2x1x128xf32> to vector<2x8x128xf32>
    %245 = vector.broadcast %240 : vector<1x8x128xf32> to vector<2x8x128xf32>
    %246 = arith.mulf %244, %245 : vector<2x8x128xf32>
    %247 = arith.subf %243, %246 : vector<2x8x128xf32>
    %248 = arith.addf %216, %247 : vector<2x8x128xf32>
    %249 = vector.broadcast %228 : vector<2x1x128xf32> to vector<2x8x128xf32>
    %250 = vector.broadcast %240 : vector<1x8x128xf32> to vector<2x8x128xf32>
    %251 = arith.mulf %249, %250 : vector<2x8x128xf32>
    %252 = vector.broadcast %232 : vector<2x1x128xf32> to vector<2x8x128xf32>
    %253 = vector.broadcast %236 : vector<1x8x128xf32> to vector<2x8x128xf32>
    %254 = arith.mulf %252, %253 : vector<2x8x128xf32>
    %255 = arith.addf %251, %254 : vector<2x8x128xf32>
    %256 = arith.addf %224, %255 : vector<2x8x128xf32>
    %c8_i32 = arith.constant 8 : i32
    %c0_63 = arith.constant 0 : index
    %c0_64 = arith.constant 0 : index
    %c0_65 = arith.constant 0 : index
    %257 = vector.load %arg6[%c0_63, %c0_64, %c0_65] : memref<2x8x128xf32, #tpu.memory_space<vmem>>, vector<2x8x128xf32>
    tpu.vector_store %arg6[%c0_63, %c0_64, %c0_65], %248 {strides = array<i32>} : memref<2x8x128xf32, #tpu.memory_space<vmem>>, vector<2x8x128xf32>,
    %c0_66 = arith.constant 0 : index
    %c0_67 = arith.constant 0 : index
    %c0_68 = arith.constant 0 : index
    %258 = vector.load %arg7[%c0_66, %c0_67, %c0_68] : memref<2x8x128xf32, #tpu.memory_space<vmem>>, vector<2x8x128xf32>
    tpu.vector_store %arg7[%c0_66, %c0_67, %c0_68], %256 {strides = array<i32>} : memref<2x8x128xf32, #tpu.memory_space<vmem>>, vector<2x8x128xf32>,
    return
  }
  func.func @transform_0(%arg0: i32, %arg1: i32) -> (i32, i32, i32) {
    %c0_i32 = arith.constant 0 : i32
    %c0_i32_0 = arith.constant 0 : i32
    %c0_i32_1 = arith.constant 0 : i32
    return %c0_i32, %c0_i32_0, %arg1 : i32, i32, i32
  }
  func.func @transform_1(%arg0: i32, %arg1: i32) -> (i32, i32, i32) {
    %c0_i32 = arith.constant 0 : i32
    %c0_i32_0 = arith.constant 0 : i32
    %c0_i32_1 = arith.constant 0 : i32
    return %c0_i32, %c0_i32_0, %arg1 : i32, i32, i32
  }
  func.func @transform_2(%arg0: i32, %arg1: i32) -> (i32, i32, i32) {
    %c0_i32 = arith.constant 0 : i32
    %c0_i32_0 = arith.constant 0 : i32
    return %c0_i32, %arg0, %arg1 : i32, i32, i32
  }
  func.func @transform_3(%arg0: i32, %arg1: i32) -> (i32, i32, i32) {
    %c0_i32 = arith.constant 0 : i32
    %c0_i32_0 = arith.constant 0 : i32
    return %c0_i32, %arg0, %arg1 : i32, i32, i32
  }
  func.func @transform_4(%arg0: i32, %arg1: i32) -> (i32, i32, i32) {
    %c0_i32 = arith.constant 0 : i32
    %c0_i32_0 = arith.constant 0 : i32
    return %c0_i32, %arg0, %arg1 : i32, i32, i32
  }
  func.func @transform_5(%arg0: i32, %arg1: i32) -> (i32, i32, i32) {
    %c0_i32 = arith.constant 0 : i32
    %c0_i32_0 = arith.constant 0 : i32
    return %c0_i32, %arg0, %arg1 : i32, i32, i32
  }
}

module attributes {stable_mosaic.version = 11 : i64} {
  func.func @_pointwise_add_kernel(%arg0: i32, %arg1: memref<2x8x256xf32, #tpu.memory_space<vmem>>, %arg2: memref<8x8xf32, #tpu.memory_space<vmem>>, %arg3: memref<8x1xf32, #tpu.memory_space<vmem>>, %arg4: memref<2x8x256xf32, #tpu.memory_space<vmem>>, %arg5: memref<2x8x256xf32, #tpu.memory_space<vmem>>) attributes {dimension_semantics = [#tpu.dimension_semantics<parallel>], iteration_bounds = array<i64: 1>, scalar_prefetch = 0 : i64, scratch_operands = 0 : i64, tpu.core_type = #tpu.core_type<tc>, window_params = [{transform_indices = @transform_0, window_bounds = array<i64: 2, 8, 256>}, {pipeline_mode = #tpu.pipeline_mode<synchronous>, transform_indices = @transform_1, window_bounds = array<i64: 8, 8>}, {pipeline_mode = #tpu.pipeline_mode<synchronous>, transform_indices = @transform_2, window_bounds = array<i64: 8, 1>}, {transform_indices = @transform_3, window_bounds = array<i64: 2, 8, 256>}, {transform_indices = @transform_4, window_bounds = array<i64: 2, 8, 256>}]} {
    %c0 = arith.constant 0 : index
    %c0_0 = arith.constant 0 : index
    %0 = vector.load %arg2[%c0, %c0_0] : memref<8x8xf32, #tpu.memory_space<vmem>>, vector<8x8xf32>
    %c0_1 = arith.constant 0 : index
    %c0_2 = arith.constant 0 : index
    %1 = vector.load %arg3[%c0_1, %c0_2] : memref<8x1xf32, #tpu.memory_space<vmem>>, vector<8x1xf32>
    %c0_i32 = arith.constant 0 : i32
    %2 = arith.index_cast %c0_i32 : i32 to index
    %c0_3 = arith.constant 0 : index
    %c0_4 = arith.constant 0 : index
    %3 = vector.load %arg1[%2, %c0_3, %c0_4] : memref<2x8x256xf32, #tpu.memory_space<vmem>>, vector<1x8x256xf32>
    %4 = vector.shape_cast %3 : vector<1x8x256xf32> to vector<8x256xf32>
    %cst = arith.constant dense<0.000000e+00> : vector<8x256xf32>
    %5 = tpu.matmul %0, %4, %cst {dimension_numbers = #tpu.dot_dimension_numbers<[1], [0], [0], [1], [0, 0, 1, 1], [], []>} : vector<8x8xf32>, vector<8x256xf32>, vector<8x256xf32> -> vector<8x256xf32>
    %6 = vector.broadcast %1 : vector<8x1xf32> to vector<8x256xf32>
    %7 = arith.addf %5, %6 : vector<8x256xf32>
    %8 = arith.index_cast %c0_i32 : i32 to index
    %c0_5 = arith.constant 0 : index
    %c0_6 = arith.constant 0 : index
    %9 = vector.load %arg4[%8, %c0_5, %c0_6] : memref<2x8x256xf32, #tpu.memory_space<vmem>>, vector<1x8x256xf32>
    %10 = vector.shape_cast %9 : vector<1x8x256xf32> to vector<8x256xf32>
    %11 = arith.addf %7, %10 : vector<8x256xf32>
    %12 = arith.index_cast %c0_i32 : i32 to index
    %c0_7 = arith.constant 0 : index
    %c0_8 = arith.constant 0 : index
    %13 = vector.load %arg5[%12, %c0_7, %c0_8] : memref<2x8x256xf32, #tpu.memory_space<vmem>>, vector<1x8x256xf32>
    %14 = vector.shape_cast %13 : vector<1x8x256xf32> to vector<8x256xf32>
    %15 = vector.shape_cast %11 : vector<8x256xf32> to vector<1x8x256xf32>
    tpu.vector_store %arg5[%12, %c0_7, %c0_8], %15 {strides = array<i32>} : memref<2x8x256xf32, #tpu.memory_space<vmem>>, vector<1x8x256xf32>,
    %c1_i32 = arith.constant 1 : i32
    %16 = arith.index_cast %c1_i32 : i32 to index
    %c0_9 = arith.constant 0 : index
    %c0_10 = arith.constant 0 : index
    %17 = vector.load %arg1[%16, %c0_9, %c0_10] : memref<2x8x256xf32, #tpu.memory_space<vmem>>, vector<1x8x256xf32>
    %18 = vector.shape_cast %17 : vector<1x8x256xf32> to vector<8x256xf32>
    %cst_11 = arith.constant dense<0.000000e+00> : vector<8x256xf32>
    %19 = tpu.matmul %0, %18, %cst_11 {dimension_numbers = #tpu.dot_dimension_numbers<[1], [0], [0], [1], [0, 0, 1, 1], [], []>} : vector<8x8xf32>, vector<8x256xf32>, vector<8x256xf32> -> vector<8x256xf32>
    %20 = vector.broadcast %1 : vector<8x1xf32> to vector<8x256xf32>
    %21 = arith.addf %19, %20 : vector<8x256xf32>
    %22 = arith.index_cast %c1_i32 : i32 to index
    %c0_12 = arith.constant 0 : index
    %c0_13 = arith.constant 0 : index
    %23 = vector.load %arg4[%22, %c0_12, %c0_13] : memref<2x8x256xf32, #tpu.memory_space<vmem>>, vector<1x8x256xf32>
    %24 = vector.shape_cast %23 : vector<1x8x256xf32> to vector<8x256xf32>
    %25 = arith.addf %21, %24 : vector<8x256xf32>
    %26 = arith.index_cast %c1_i32 : i32 to index
    %c0_14 = arith.constant 0 : index
    %c0_15 = arith.constant 0 : index
    %27 = vector.load %arg5[%26, %c0_14, %c0_15] : memref<2x8x256xf32, #tpu.memory_space<vmem>>, vector<1x8x256xf32>
    %28 = vector.shape_cast %27 : vector<1x8x256xf32> to vector<8x256xf32>
    %29 = vector.shape_cast %25 : vector<8x256xf32> to vector<1x8x256xf32>
    tpu.vector_store %arg5[%26, %c0_14, %c0_15], %29 {strides = array<i32>} : memref<2x8x256xf32, #tpu.memory_space<vmem>>, vector<1x8x256xf32>,
    %c2_i32 = arith.constant 2 : i32
    return
  }
  func.func @transform_0(%arg0: i32) -> (i32, i32, i32) {
    %c0_i32 = arith.constant 0 : i32
    %c0_i32_0 = arith.constant 0 : i32
    %c0_i32_1 = arith.constant 0 : i32
    return %c0_i32, %c0_i32_0, %arg0 : i32, i32, i32
  }
  func.func @transform_1(%arg0: i32) -> (i32, i32) {
    %c0_i32 = arith.constant 0 : i32
    %c0_i32_0 = arith.constant 0 : i32
    %c0_i32_1 = arith.constant 0 : i32
    return %c0_i32, %c0_i32_0 : i32, i32
  }
  func.func @transform_2(%arg0: i32) -> (i32, i32) {
    %c0_i32 = arith.constant 0 : i32
    %c0_i32_0 = arith.constant 0 : i32
    %c0_i32_1 = arith.constant 0 : i32
    return %c0_i32, %c0_i32_0 : i32, i32
  }
  func.func @transform_3(%arg0: i32) -> (i32, i32, i32) {
    %c0_i32 = arith.constant 0 : i32
    %c0_i32_0 = arith.constant 0 : i32
    %c0_i32_1 = arith.constant 0 : i32
    return %c0_i32, %c0_i32_0, %arg0 : i32, i32, i32
  }
  func.func @transform_4(%arg0: i32) -> (i32, i32, i32) {
    %c0_i32 = arith.constant 0 : i32
    %c0_i32_0 = arith.constant 0 : i32
    %c0_i32_1 = arith.constant 0 : i32
    return %c0_i32, %c0_i32_0, %arg0 : i32, i32, i32
  }
}

</mosaic_0001>

<llo_original>
// kernel: _lambda_.2
$region0: #{_lambda_.2}
  #allocation0 [shape = 'u32[]', space=smem, size = 0x4, offset = 0x4, fixed_abs, tag = 'smem constant byte address 0x4 - core index']
  #allocation1 [shape = 'u32[144,128]{1,0:T(1,128)}', space=vmem, size = 0x12000, scoped, tag = 'internal scratch']
  %s0 = inlined_call_operand.vmem [shape: f32[8,2,128], index: 0, kind: input, shape index: {}]
  %s1 = inlined_call_operand.vmem [shape: f32[8,2,128], index: 1, kind: input, shape index: {}]
  %s2 = inlined_call_operand.vmem [shape: f32[8,8,128], index: 2, kind: input, shape index: {}]
  %s3 = inlined_call_operand.vmem [shape: f32[8,8,128], index: 3, kind: input, shape index: {}]
  %s4 = inlined_call_operand.vmem [shape: f32[2,8,128], index: 4, kind: output, shape index: {0}]
  %s5 = inlined_call_operand.vmem [shape: f32[2,8,128], index: 5, kind: output, shape index: {1}]
  %6 = xla_tuple %s4, %s5
  %s7 = sld [smem:[#allocation0]]
  $region34: #{_lambda_.2} parent=0
    _
  %s9 = ssub.s32 1, %s7
  %s10 = scalar_select 0, %s9, %s7
  // Predicated region
  $region2: #{_lambda_.2} parent=0 // pred_check
    _
  $region3: #{_lambda_.2} parent=0 // pred_check_branch
    %12 = sbr.rel (0) target = $region5
  $region4: #{_lambda_.2} parent=0 // pred_region
    _
  $region5: #{_lambda_.2} parent=0 // pred_fallthru
    _
  // Predicated region
  $region6: #{_lambda_.2} parent=0 // pred_check
    _
  $region7: #{_lambda_.2} parent=0 // pred_check_branch
    %14 = sbr.rel (0) target = $region9
  $region8: #{_lambda_.2} parent=0 // pred_region
    _
  $region9: #{_lambda_.2} parent=0 // pred_fallthru
    _
  // Predicated region
  $region10: #{_lambda_.2} parent=0 // pred_check
    _
  $region11: #{_lambda_.2} parent=0 // pred_check_branch
    %16 = sbr.rel (0) target = $region13
  $region12: #{_lambda_.2} parent=0 // pred_region
    _
  $region13: #{_lambda_.2} parent=0 // pred_fallthru
    _
  // Predicated region
  $region14: #{_lambda_.2} parent=0 // pred_check
    _
  $region15: #{_lambda_.2} parent=0 // pred_check_branch
    %18 = sbr.rel (0) target = $region17
  $region16: #{_lambda_.2} parent=0 // pred_region
    _
  $region17: #{_lambda_.2} parent=0 // pred_fallthru
    _
  %v19 = vld [vmem:[%s0] sm:$0x3]
  %v22 = vunpack.c.l.s4 1966171168
  %v23 = vunpack.c.0.s8 %v22
  %v24 = vlaneseq
  %v25 = vshrl.u32 %v24, 7
  %v26 = vsub.s32 %v23, %v25
  %v27 = vrot.slane %v19, %v26
  %v28 = vcombine.high %v27, %v27
  %v30 = vunpack.c.l.s4 1966171168
  %v31 = vunpack.c.0.s8 %v30
  %v32 = vlaneseq
  %v33 = vshrl.u32 %v32, 7
  %v34 = vsub.s32 %v31, %v33
  %v35 = vrot.slane %v27, %v34
  %v37 = vunpack.c.l.s4 1966171168
  %v38 = vunpack.c.0.s8 %v37
  %v39 = vlaneseq
  %v40 = vshrl.u32 %v39, 7
  %v41 = vsub.s32 %v38, %v40
  %v42 = vrot.slane %v28, %v41
  %v43 = vld [vmem:[%s1] sm:$0x3]
  %v46 = vunpack.c.l.s4 1966171168
  %v47 = vunpack.c.0.s8 %v46
  %v48 = vlaneseq
  %v49 = vshrl.u32 %v48, 7
  %v50 = vsub.s32 %v47, %v49
  %v51 = vrot.slane %v43, %v50
  %v52 = vcombine.high %v51, %v51
  %v54 = vunpack.c.l.s4 1966171168
  %v55 = vunpack.c.0.s8 %v54
  %v56 = vlaneseq
  %v57 = vshrl.u32 %v56, 7
  %v58 = vsub.s32 %v55, %v57
  %v59 = vrot.slane %v51, %v58
  %v61 = vunpack.c.l.s4 1966171168
  %v62 = vunpack.c.0.s8 %v61
  %v63 = vlaneseq
  %v64 = vshrl.u32 %v63, 7
  %v65 = vsub.s32 %v62, %v64
  %v66 = vrot.slane %v52, %v65
  %v67 = vld [vmem:[%s2] sm:$0xff]
  %v68 = vld [vmem:[%s3] sm:$0xff]
  %v69 = vlaneseq
  %v70 = vshrl.u32 %v69, 7
  %v71 = vsub.s32 0, %v70
  %v72 = vrot.slane %v35, %v71
  %v73 = vlaneseq
  %v74 = vshrl.u32 %v73, 7
  %v75 = vsub.s32 0, %v74
  %v76 = vrot.slane %v42, %v75
  %v79 = vmul.f32 %v72, %v67
  %v80 = vmul.f32 %v76, %v67
  %v81 = vlaneseq
  %v82 = vshrl.u32 %v81, 7
  %v83 = vsub.s32 0, %v82
  %v84 = vrot.slane %v59, %v83
  %v85 = vlaneseq
  %v86 = vshrl.u32 %v85, 7
  %v87 = vsub.s32 0, %v86
  %v88 = vrot.slane %v66, %v87
  %v91 = vmul.f32 %v84, %v68
  %v92 = vmul.f32 %v88, %v68
  %v93 = vsub.f32 %v79, %v91
  %v94 = vsub.f32 %v80, %v92
  %v95 = vadd.f32 %v93, 0.0
  %v96 = vadd.f32 %v94, 0.0
  %v97 = vmul.f32 %v72, %v68
  %v98 = vmul.f32 %v76, %v68
  %v99 = vmul.f32 %v84, %v67
  %v100 = vmul.f32 %v88, %v67
  %v101 = vadd.f32 %v97, %v99
  %v102 = vadd.f32 %v98, %v100
  %v103 = vadd.f32 %v101, 0.0
  %v104 = vadd.f32 %v102, 0.0
  %s105 = scalar_lea.vmem %s0, 2
  %v106 = vld [vmem:[%s105] sm:$0x3]
  %v109 = vunpack.c.l.s4 1966171168
  %v110 = vunpack.c.0.s8 %v109
  %v111 = vlaneseq
  %v112 = vshrl.u32 %v111, 7
  %v113 = vsub.s32 %v110, %v112
  %v114 = vrot.slane %v106, %v113
  %v115 = vcombine.high %v114, %v114
  %v117 = vunpack.c.l.s4 1966171168
  %v118 = vunpack.c.0.s8 %v117
  %v119 = vlaneseq
  %v120 = vshrl.u32 %v119, 7
  %v121 = vsub.s32 %v118, %v120
  %v122 = vrot.slane %v114, %v121
  %v124 = vunpack.c.l.s4 1966171168
  %v125 = vunpack.c.0.s8 %v124
  %v126 = vlaneseq
  %v127 = vshrl.u32 %v126, 7
  %v128 = vsub.s32 %v125, %v127
  %v129 = vrot.slane %v115, %v128
  %s130 = scalar_lea.vmem %s1, 2
  %v131 = vld [vmem:[%s130] sm:$0x3]
  %v134 = vunpack.c.l.s4 1966171168
  %v135 = vunpack.c.0.s8 %v134
  %v136 = vlaneseq
  %v137 = vshrl.u32 %v136, 7
  %v138 = vsub.s32 %v135, %v137
  %v139 = vrot.slane %v131, %v138
  %v140 = vcombine.high %v139, %v139
  %v142 = vunpack.c.l.s4 1966171168
  %v143 = vunpack.c.0.s8 %v142
  %v144 = vlaneseq
  %v145 = vshrl.u32 %v144, 7
  %v146 = vsub.s32 %v143, %v145
  %v147 = vrot.slane %v139, %v146
  %v149 = vunpack.c.l.s4 1966171168
  %v150 = vunpack.c.0.s8 %v149
  %v151 = vlaneseq
  %v152 = vshrl.u32 %v151, 7
  %v153 = vsub.s32 %v150, %v152
  %v154 = vrot.slane %v140, %v153
  %s155 = scalar_lea.vmem %s2, 8
  %v156 = vld [vmem:[%s155] sm:$0xff]
  %s157 = scalar_lea.vmem %s3, 8
  %v158 = vld [vmem:[%s157] sm:$0xff]
  %v159 = vlaneseq
  %v160 = vshrl.u32 %v159, 7
  %v161 = vsub.s32 0, %v160
  %v162 = vrot.slane %v122, %v161
  %v163 = vlaneseq
  %v164 = vshrl.u32 %v163, 7
  %v165 = vsub.s32 0, %v164
  %v166 = vrot.slane %v129, %v165
  %v169 = vmul.f32 %v162, %v156
  %v170 = vmul.f32 %v166, %v156
  %v171 = vlaneseq
  %v172 = vshrl.u32 %v171, 7
  %v173 = vsub.s32 0, %v172
  %v174 = vrot.slane %v147, %v173
  %v175 = vlaneseq
  %v176 = vshrl.u32 %v175, 7
  %v177 = vsub.s32 0, %v176
  %v178 = vrot.slane %v154, %v177
  %v181 = vmul.f32 %v174, %v158
  %v182 = vmul.f32 %v178, %v158
  %v183 = vsub.f32 %v169, %v181
  %v184 = vsub.f32 %v170, %v182
  %v185 = vadd.f32 %v95, %v183
  %v186 = vadd.f32 %v96, %v184
  %v187 = vmul.f32 %v162, %v158
  %v188 = vmul.f32 %v166, %v158
  %v189 = vmul.f32 %v174, %v156
  %v190 = vmul.f32 %v178, %v156
  %v191 = vadd.f32 %v187, %v189
  %v192 = vadd.f32 %v188, %v190
  %v193 = vadd.f32 %v103, %v191
  %v194 = vadd.f32 %v104, %v192
  %s195 = scalar_lea.vmem %s0, 4
  %v196 = vld [vmem:[%s195] sm:$0x3]
  %v199 = vunpack.c.l.s4 1966171168
  %v200 = vunpack.c.0.s8 %v199
  %v201 = vlaneseq
  %v202 = vshrl.u32 %v201, 7
  %v203 = vsub.s32 %v200, %v202
  %v204 = vrot.slane %v196, %v203
  %v205 = vcombine.high %v204, %v204
  %v207 = vunpack.c.l.s4 1966171168
  %v208 = vunpack.c.0.s8 %v207
  %v209 = vlaneseq
  %v210 = vshrl.u32 %v209, 7
  %v211 = vsub.s32 %v208, %v210
  %v212 = vrot.slane %v204, %v211
  %v214 = vunpack.c.l.s4 1966171168
  %v215 = vunpack.c.0.s8 %v214
  %v216 = vlaneseq
  %v217 = vshrl.u32 %v216, 7
  %v218 = vsub.s32 %v215, %v217
  %v219 = vrot.slane %v205, %v218
  %s220 = scalar_lea.vmem %s1, 4
  %v221 = vld [vmem:[%s220] sm:$0x3]
  %v224 = vunpack.c.l.s4 1966171168
  %v225 = vunpack.c.0.s8 %v224
  %v226 = vlaneseq
  %v227 = vshrl.u32 %v226, 7
  %v228 = vsub.s32 %v225, %v227
  %v229 = vrot.slane %v221, %v228
  %v230 = vcombine.high %v229, %v229
  %v232 = vunpack.c.l.s4 1966171168
  %v233 = vunpack.c.0.s8 %v232
  %v234 = vlaneseq
  %v235 = vshrl.u32 %v234, 7
  %v236 = vsub.s32 %v233, %v235
  %v237 = vrot.slane %v229, %v236
  %v239 = vunpack.c.l.s4 1966171168
  %v240 = vunpack.c.0.s8 %v239
  %v241 = vlaneseq
  %v242 = vshrl.u32 %v241, 7
  %v243 = vsub.s32 %v240, %v242
  %v244 = vrot.slane %v230, %v243
  %s245 = scalar_lea.vmem %s2, 16
  %v246 = vld [vmem:[%s245] sm:$0xff]
  %s247 = scalar_lea.vmem %s3, 16
  %v248 = vld [vmem:[%s247] sm:$0xff]
  %v249 = vlaneseq
  %v250 = vshrl.u32 %v249, 7
  %v251 = vsub.s32 0, %v250
  %v252 = vrot.slane %v212, %v251
  %v253 = vlaneseq
  %v254 = vshrl.u32 %v253, 7
  %v255 = vsub.s32 0, %v254
  %v256 = vrot.slane %v219, %v255
  %v259 = vmul.f32 %v252, %v246
  %v260 = vmul.f32 %v256, %v246
  %v261 = vlaneseq
  %v262 = vshrl.u32 %v261, 7
  %v263 = vsub.s32 0, %v262
  %v264 = vrot.slane %v237, %v263
  %v265 = vlaneseq
  %v266 = vshrl.u32 %v265, 7
  %v267 = vsub.s32 0, %v266
  %v268 = vrot.slane %v244, %v267
  %v271 = vmul.f32 %v264, %v248
  %v272 = vmul.f32 %v268, %v248
  %v273 = vsub.f32 %v259, %v271
  %v274 = vsub.f32 %v260, %v272
  %v275 = vadd.f32 %v185, %v273
  %v276 = vadd.f32 %v186, %v274
  %v277 = vmul.f32 %v252, %v248
  %v278 = vmul.f32 %v256, %v248
  %v279 = vmul.f32 %v264, %v246
  %v280 = vmul.f32 %v268, %v246
  %v281 = vadd.f32 %v277, %v279
  %v282 = vadd.f32 %v278, %v280
  %v283 = vadd.f32 %v193, %v281
  %v284 = vadd.f32 %v194, %v282
  %s285 = scalar_lea.vmem %s0, 6
  %v286 = vld [vmem:[%s285] sm:$0x3]
  %v289 = vunpack.c.l.s4 1966171168
  %v290 = vunpack.c.0.s8 %v289
  %v291 = vlaneseq
  %v292 = vshrl.u32 %v291, 7
  %v293 = vsub.s32 %v290, %v292
  %v294 = vrot.slane %v286, %v293
  %v295 = vcombine.high %v294, %v294
  %v297 = vunpack.c.l.s4 1966171168
  %v298 = vunpack.c.0.s8 %v297
  %v299 = vlaneseq
  %v300 = vshrl.u32 %v299, 7
  %v301 = vsub.s32 %v298, %v300
  %v302 = vrot.slane %v294, %v301
  %v304 = vunpack.c.l.s4 1966171168
  %v305 = vunpack.c.0.s8 %v304
  %v306 = vlaneseq
  %v307 = vshrl.u32 %v306, 7
  %v308 = vsub.s32 %v305, %v307
  %v309 = vrot.slane %v295, %v308
  %s310 = scalar_lea.vmem %s1, 6
  %v311 = vld [vmem:[%s310] sm:$0x3]
  %v314 = vunpack.c.l.s4 1966171168
  %v315 = vunpack.c.0.s8 %v314
  %v316 = vlaneseq
  %v317 = vshrl.u32 %v316, 7
  %v318 = vsub.s32 %v315, %v317
  %v319 = vrot.slane %v311, %v318
  %v320 = vcombine.high %v319, %v319
  %v322 = vunpack.c.l.s4 1966171168
  %v323 = vunpack.c.0.s8 %v322
  %v324 = vlaneseq
  %v325 = vshrl.u32 %v324, 7
  %v326 = vsub.s32 %v323, %v325
  %v327 = vrot.slane %v319, %v326
  %v329 = vunpack.c.l.s4 1966171168
  %v330 = vunpack.c.0.s8 %v329
  %v331 = vlaneseq
  %v332 = vshrl.u32 %v331, 7
  %v333 = vsub.s32 %v330, %v332
  %v334 = vrot.slane %v320, %v333
  %s335 = scalar_lea.vmem %s2, 24
  %v336 = vld [vmem:[%s335] sm:$0xff]
  %s337 = scalar_lea.vmem %s3, 24
  %v338 = vld [vmem:[%s337] sm:$0xff]
  %v339 = vlaneseq
  %v340 = vshrl.u32 %v339, 7
  %v341 = vsub.s32 0, %v340
  %v342 = vrot.slane %v302, %v341
  %v343 = vlaneseq
  %v344 = vshrl.u32 %v343, 7
  %v345 = vsub.s32 0, %v344
  %v346 = vrot.slane %v309, %v345
  %v349 = vmul.f32 %v342, %v336
  %v350 = vmul.f32 %v346, %v336
  %v351 = vlaneseq
  %v352 = vshrl.u32 %v351, 7
  %v353 = vsub.s32 0, %v352
  %v354 = vrot.slane %v327, %v353
  %v355 = vlaneseq
  %v356 = vshrl.u32 %v355, 7
  %v357 = vsub.s32 0, %v356
  %v358 = vrot.slane %v334, %v357
  %v361 = vmul.f32 %v354, %v338
  %v362 = vmul.f32 %v358, %v338
  %v363 = vsub.f32 %v349, %v361
  %v364 = vsub.f32 %v350, %v362
  %v365 = vadd.f32 %v275, %v363
  %v366 = vadd.f32 %v276, %v364
  %v367 = vmul.f32 %v342, %v338
  %v368 = vmul.f32 %v346, %v338
  %v369 = vmul.f32 %v354, %v336
  %v370 = vmul.f32 %v358, %v336
  %v371 = vadd.f32 %v367, %v369
  %v372 = vadd.f32 %v368, %v370
  %v373 = vadd.f32 %v283, %v371
  %v374 = vadd.f32 %v284, %v372
  %s375 = scalar_lea.vmem %s0, 8
  %v376 = vld [vmem:[%s375] sm:$0x3]
  %v379 = vunpack.c.l.s4 1966171168
  %v380 = vunpack.c.0.s8 %v379
  %v381 = vlaneseq
  %v382 = vshrl.u32 %v381, 7
  %v383 = vsub.s32 %v380, %v382
  %v384 = vrot.slane %v376, %v383
  %v385 = vcombine.high %v384, %v384
  %v387 = vunpack.c.l.s4 1966171168
  %v388 = vunpack.c.0.s8 %v387
  %v389 = vlaneseq
  %v390 = vshrl.u32 %v389, 7
  %v391 = vsub.s32 %v388, %v390
  %v392 = vrot.slane %v384, %v391
  %v394 = vunpack.c.l.s4 1966171168
  %v395 = vunpack.c.0.s8 %v394
  %v396 = vlaneseq
  %v397 = vshrl.u32 %v396, 7
  %v398 = vsub.s32 %v395, %v397
  %v399 = vrot.slane %v385, %v398
  %s400 = scalar_lea.vmem %s1, 8
  %v401 = vld [vmem:[%s400] sm:$0x3]
  %v404 = vunpack.c.l.s4 1966171168
  %v405 = vunpack.c.0.s8 %v404
  %v406 = vlaneseq
  %v407 = vshrl.u32 %v406, 7
  %v408 = vsub.s32 %v405, %v407
  %v409 = vrot.slane %v401, %v408
  %v410 = vcombine.high %v409, %v409
  %v412 = vunpack.c.l.s4 1966171168
  %v413 = vunpack.c.0.s8 %v412
  %v414 = vlaneseq
  %v415 = vshrl.u32 %v414, 7
  %v416 = vsub.s32 %v413, %v415
  %v417 = vrot.slane %v409, %v416
  %v419 = vunpack.c.l.s4 1966171168
  %v420 = vunpack.c.0.s8 %v419
  %v421 = vlaneseq
  %v422 = vshrl.u32 %v421, 7
  %v423 = vsub.s32 %v420, %v422
  %v424 = vrot.slane %v410, %v423
  %s425 = scalar_lea.vmem %s2, 32
  %v426 = vld [vmem:[%s425] sm:$0xff]
  %s427 = scalar_lea.vmem %s3, 32
  %v428 = vld [vmem:[%s427] sm:$0xff]
  %v429 = vlaneseq
  %v430 = vshrl.u32 %v429, 7
  %v431 = vsub.s32 0, %v430
  %v432 = vrot.slane %v392, %v431
  %v433 = vlaneseq
  %v434 = vshrl.u32 %v433, 7
  %v435 = vsub.s32 0, %v434
  %v436 = vrot.slane %v399, %v435
  %v439 = vmul.f32 %v432, %v426
  %v440 = vmul.f32 %v436, %v426
  %v441 = vlaneseq
  %v442 = vshrl.u32 %v441, 7
  %v443 = vsub.s32 0, %v442
  %v444 = vrot.slane %v417, %v443
  %v445 = vlaneseq
  %v446 = vshrl.u32 %v445, 7
  %v447 = vsub.s32 0, %v446
  %v448 = vrot.slane %v424, %v447
  %v451 = vmul.f32 %v444, %v428
  %v452 = vmul.f32 %v448, %v428
  %v453 = vsub.f32 %v439, %v451
  %v454 = vsub.f32 %v440, %v452
  %v455 = vadd.f32 %v365, %v453
  %v456 = vadd.f32 %v366, %v454
  %v457 = vmul.f32 %v432, %v428
  %v458 = vmul.f32 %v436, %v428
  %v459 = vmul.f32 %v444, %v426
  %v460 = vmul.f32 %v448, %v426
  %v461 = vadd.f32 %v457, %v459
  %v462 = vadd.f32 %v458, %v460
  %v463 = vadd.f32 %v373, %v461
  %v464 = vadd.f32 %v374, %v462
  %s465 = scalar_lea.vmem %s0, 10
  %v466 = vld [vmem:[%s465] sm:$0x3]
  %v469 = vunpack.c.l.s4 1966171168
  %v470 = vunpack.c.0.s8 %v469
  %v471 = vlaneseq
  %v472 = vshrl.u32 %v471, 7
  %v473 = vsub.s32 %v470, %v472
  %v474 = vrot.slane %v466, %v473
  %v475 = vcombine.high %v474, %v474
  %v477 = vunpack.c.l.s4 1966171168
  %v478 = vunpack.c.0.s8 %v477
  %v479 = vlaneseq
  %v480 = vshrl.u32 %v479, 7
  %v481 = vsub.s32 %v478, %v480
  %v482 = vrot.slane %v474, %v481
  %v484 = vunpack.c.l.s4 1966171168
  %v485 = vunpack.c.0.s8 %v484
  %v486 = vlaneseq
  %v487 = vshrl.u32 %v486, 7
  %v488 = vsub.s32 %v485, %v487
  %v489 = vrot.slane %v475, %v488
  %s490 = scalar_lea.vmem %s1, 10
  %v491 = vld [vmem:[%s490] sm:$0x3]
  %v494 = vunpack.c.l.s4 1966171168
  %v495 = vunpack.c.0.s8 %v494
  %v496 = vlaneseq
  %v497 = vshrl.u32 %v496, 7
  %v498 = vsub.s32 %v495, %v497
  %v499 = vrot.slane %v491, %v498
  %v500 = vcombine.high %v499, %v499
  %v502 = vunpack.c.l.s4 1966171168
  %v503 = vunpack.c.0.s8 %v502
  %v504 = vlaneseq
  %v505 = vshrl.u32 %v504, 7
  %v506 = vsub.s32 %v503, %v505
  %v507 = vrot.slane %v499, %v506
  %v509 = vunpack.c.l.s4 1966171168
  %v510 = vunpack.c.0.s8 %v509
  %v511 = vlaneseq
  %v512 = vshrl.u32 %v511, 7
  %v513 = vsub.s32 %v510, %v512
  %v514 = vrot.slane %v500, %v513
  %s515 = scalar_lea.vmem %s2, 40
  %v516 = vld [vmem:[%s515] sm:$0xff]
  %s517 = scalar_lea.vmem %s3, 40
  %v518 = vld [vmem:[%s517] sm:$0xff]
  %v519 = vlaneseq
  %v520 = vshrl.u32 %v519, 7
  %v521 = vsub.s32 0, %v520
  %v522 = vrot.slane %v482, %v521
  %v523 = vlaneseq
  %v524 = vshrl.u32 %v523, 7
  %v525 = vsub.s32 0, %v524
  %v526 = vrot.slane %v489, %v525
  %v529 = vmul.f32 %v522, %v516
  %v530 = vmul.f32 %v526, %v516
  %v531 = vlaneseq
  %v532 = vshrl.u32 %v531, 7
  %v533 = vsub.s32 0, %v532
  %v534 = vrot.slane %v507, %v533
  %v535 = vlaneseq
  %v536 = vshrl.u32 %v535, 7
  %v537 = vsub.s32 0, %v536
  %v538 = vrot.slane %v514, %v537
  %v541 = vmul.f32 %v534, %v518
  %v542 = vmul.f32 %v538, %v518
  %v543 = vsub.f32 %v529, %v541
  %v544 = vsub.f32 %v530, %v542
  %v545 = vadd.f32 %v455, %v543
  %v546 = vadd.f32 %v456, %v544
  %v547 = vmul.f32 %v522, %v518
  %v548 = vmul.f32 %v526, %v518
  %v549 = vmul.f32 %v534, %v516
  %v550 = vmul.f32 %v538, %v516
  %v551 = vadd.f32 %v547, %v549
  %v552 = vadd.f32 %v548, %v550
  %v553 = vadd.f32 %v463, %v551
  %v554 = vadd.f32 %v464, %v552
  %s555 = scalar_lea.vmem %s0, 12
  %v556 = vld [vmem:[%s555] sm:$0x3]
  %v559 = vunpack.c.l.s4 1966171168
  %v560 = vunpack.c.0.s8 %v559
  %v561 = vlaneseq
  %v562 = vshrl.u32 %v561, 7
  %v563 = vsub.s32 %v560, %v562
  %v564 = vrot.slane %v556, %v563
  %v565 = vcombine.high %v564, %v564
  %v567 = vunpack.c.l.s4 1966171168
  %v568 = vunpack.c.0.s8 %v567
  %v569 = vlaneseq
  %v570 = vshrl.u32 %v569, 7
  %v571 = vsub.s32 %v568, %v570
  %v572 = vrot.slane %v564, %v571
  %v574 = vunpack.c.l.s4 1966171168
  %v575 = vunpack.c.0.s8 %v574
  %v576 = vlaneseq
  %v577 = vshrl.u32 %v576, 7
  %v578 = vsub.s32 %v575, %v577
  %v579 = vrot.slane %v565, %v578
  %s580 = scalar_lea.vmem %s1, 12
  %v581 = vld [vmem:[%s580] sm:$0x3]
  %v584 = vunpack.c.l.s4 1966171168
  %v585 = vunpack.c.0.s8 %v584
  %v586 = vlaneseq
  %v587 = vshrl.u32 %v586, 7
  %v588 = vsub.s32 %v585, %v587
  %v589 = vrot.slane %v581, %v588
  %v590 = vcombine.high %v589, %v589
  %v592 = vunpack.c.l.s4 1966171168
  %v593 = vunpack.c.0.s8 %v592
  %v594 = vlaneseq
  %v595 = vshrl.u32 %v594, 7
  %v596 = vsub.s32 %v593, %v595
  %v597 = vrot.slane %v589, %v596
  %v599 = vunpack.c.l.s4 1966171168
  %v600 = vunpack.c.0.s8 %v599
  %v601 = vlaneseq
  %v602 = vshrl.u32 %v601, 7
  %v603 = vsub.s32 %v600, %v602
  %v604 = vrot.slane %v590, %v603
  %s605 = scalar_lea.vmem %s2, 48
  %v606 = vld [vmem:[%s605] sm:$0xff]
  %s607 = scalar_lea.vmem %s3, 48
  %v608 = vld [vmem:[%s607] sm:$0xff]
  %v609 = vlaneseq
  %v610 = vshrl.u32 %v609, 7
  %v611 = vsub.s32 0, %v610
  %v612 = vrot.slane %v572, %v611
  %v613 = vlaneseq
  %v614 = vshrl.u32 %v613, 7
  %v615 = vsub.s32 0, %v614
  %v616 = vrot.slane %v579, %v615
  %v619 = vmul.f32 %v612, %v606
  %v620 = vmul.f32 %v616, %v606
  %v621 = vlaneseq
  %v622 = vshrl.u32 %v621, 7
  %v623 = vsub.s32 0, %v622
  %v624 = vrot.slane %v597, %v623
  %v625 = vlaneseq
  %v626 = vshrl.u32 %v625, 7
  %v627 = vsub.s32 0, %v626
  %v628 = vrot.slane %v604, %v627
  %v631 = vmul.f32 %v624, %v608
  %v632 = vmul.f32 %v628, %v608
  %v633 = vsub.f32 %v619, %v631
  %v634 = vsub.f32 %v620, %v632
  %v635 = vadd.f32 %v545, %v633
  %v636 = vadd.f32 %v546, %v634
  %v637 = vmul.f32 %v612, %v608
  %v638 = vmul.f32 %v616, %v608
  %v639 = vmul.f32 %v624, %v606
  %v640 = vmul.f32 %v628, %v606
  %v641 = vadd.f32 %v637, %v639
  %v642 = vadd.f32 %v638, %v640
  %v643 = vadd.f32 %v553, %v641
  %v644 = vadd.f32 %v554, %v642
  %s645 = scalar_lea.vmem %s0, 14
  %v646 = vld [vmem:[%s645] sm:$0x3]
  %v649 = vunpack.c.l.s4 1966171168
  %v650 = vunpack.c.0.s8 %v649
  %v651 = vlaneseq
  %v652 = vshrl.u32 %v651, 7
  %v653 = vsub.s32 %v650, %v652
  %v654 = vrot.slane %v646, %v653
  %v655 = vcombine.high %v654, %v654
  %v657 = vunpack.c.l.s4 1966171168
  %v658 = vunpack.c.0.s8 %v657
  %v659 = vlaneseq
  %v660 = vshrl.u32 %v659, 7
  %v661 = vsub.s32 %v658, %v660
  %v662 = vrot.slane %v654, %v661
  %v664 = vunpack.c.l.s4 1966171168
  %v665 = vunpack.c.0.s8 %v664
  %v666 = vlaneseq
  %v667 = vshrl.u32 %v666, 7
  %v668 = vsub.s32 %v665, %v667
  %v669 = vrot.slane %v655, %v668
  %s670 = scalar_lea.vmem %s1, 14
  %v671 = vld [vmem:[%s670] sm:$0x3]
  %v674 = vunpack.c.l.s4 1966171168
  %v675 = vunpack.c.0.s8 %v674
  %v676 = vlaneseq
  %v677 = vshrl.u32 %v676, 7
  %v678 = vsub.s32 %v675, %v677
  %v679 = vrot.slane %v671, %v678
  %v680 = vcombine.high %v679, %v679
  %v682 = vunpack.c.l.s4 1966171168
  %v683 = vunpack.c.0.s8 %v682
  %v684 = vlaneseq
  %v685 = vshrl.u32 %v684, 7
  %v686 = vsub.s32 %v683, %v685
  %v687 = vrot.slane %v679, %v686
  %v689 = vunpack.c.l.s4 1966171168
  %v690 = vunpack.c.0.s8 %v689
  %v691 = vlaneseq
  %v692 = vshrl.u32 %v691, 7
  %v693 = vsub.s32 %v690, %v692
  %v694 = vrot.slane %v680, %v693
  %s695 = scalar_lea.vmem %s2, 56
  %v696 = vld [vmem:[%s695] sm:$0xff]
  %s697 = scalar_lea.vmem %s3, 56
  %v698 = vld [vmem:[%s697] sm:$0xff]
  %v699 = vlaneseq
  %v700 = vshrl.u32 %v699, 7
  %v701 = vsub.s32 0, %v700
  %v702 = vrot.slane %v662, %v701
  %v703 = vlaneseq
  %v704 = vshrl.u32 %v703, 7
  %v705 = vsub.s32 0, %v704
  %v706 = vrot.slane %v669, %v705
  %v709 = vmul.f32 %v702, %v696
  %v710 = vmul.f32 %v706, %v696
  %v711 = vlaneseq
  %v712 = vshrl.u32 %v711, 7
  %v713 = vsub.s32 0, %v712
  %v714 = vrot.slane %v687, %v713
  %v715 = vlaneseq
  %v716 = vshrl.u32 %v715, 7
  %v717 = vsub.s32 0, %v716
  %v718 = vrot.slane %v694, %v717
  %v721 = vmul.f32 %v714, %v698
  %v722 = vmul.f32 %v718, %v698
  %v723 = vsub.f32 %v709, %v721
  %v724 = vsub.f32 %v710, %v722
  %v725 = vadd.f32 %v635, %v723
  %v726 = vadd.f32 %v636, %v724
  %v727 = vmul.f32 %v702, %v698
  %v728 = vmul.f32 %v706, %v698
  %v729 = vmul.f32 %v714, %v696
  %v730 = vmul.f32 %v718, %v696
  %v731 = vadd.f32 %v727, %v729
  %v732 = vadd.f32 %v728, %v730
  %v733 = vadd.f32 %v643, %v731
  %v734 = vadd.f32 %v644, %v732
  %735 = vst [vmem:[%s4] sm:$0xff] %v725
  %736 = vst [vmem:[%s4 + $0x8] sm:$0xff] %v726
  %737 = vst [vmem:[%s5] sm:$0xff] %v733
  %738 = vst [vmem:[%s5 + $0x8] sm:$0xff] %v734
  // Predicated region
  $region18: #{_lambda_.2} parent=0 // pred_check
    _
  $region19: #{_lambda_.2} parent=0 // pred_check_branch
    %740 = sbr.rel (0) target = $region21
  $region20: #{_lambda_.2} parent=0 // pred_region
    _
  $region21: #{_lambda_.2} parent=0 // pred_fallthru
    _
  // Predicated region
  $region22: #{_lambda_.2} parent=0 // pred_check
    _
  $region23: #{_lambda_.2} parent=0 // pred_check_branch
    %742 = sbr.rel (0) target = $region25
  $region24: #{_lambda_.2} parent=0 // pred_region
    _
  $region25: #{_lambda_.2} parent=0 // pred_fallthru
    _
  // Predicated region
  $region26: #{_lambda_.2} parent=0 // pred_check
    _
  $region27: #{_lambda_.2} parent=0 // pred_check_branch
    %744 = sbr.rel (0) target = $region29
  $region28: #{_lambda_.2} parent=0 // pred_region
    _
  $region29: #{_lambda_.2} parent=0 // pred_fallthru
    _
  // Predicated region
  $region30: #{_lambda_.2} parent=0 // pred_check
    _
  $region31: #{_lambda_.2} parent=0 // pred_check_branch
    %746 = sbr.rel (0) target = $region33
  $region32: #{_lambda_.2} parent=0 // pred_region
    _
  $region33: #{_lambda_.2} parent=0 // pred_fallthru
    _

// kernel: reverse.0
$region0: #{reverse.0}
  %s0 = inlined_call_operand.vmem [shape: f32[2,8,16,7], index: 0, kind: input, shape index: {}]
  %s1 = inlined_call_operand.vmem [shape: f32[2,8,16,7], index: 1, kind: output, shape index: {}]
  $region1: #{reverse.0} parent=0
    #allocation0 [shape = 'u8[131072]{0}', space=vmem, size = 0x20000, scoped, tag = 'operand span for operand 0']
    #allocation1 [shape = 'u8[65536]{0}', space=vmem, size = 0x10000, scoped, tag = 'operand span for operand 1']
    %s2 = scalar_lea.vmem [#allocation0], 8
    // Predicated region
    $region2: #{reverse.0} parent=1 // pred_check
      _
    $region3: #{reverse.0} parent=1 // pred_check_branch
      %4 = sbr.rel (0) target = $region5
    $region4: #{reverse.0} parent=1 // pred_region
      // Predicated region
      $region6: #{reverse.0} parent=4 // pred_check
        _
      $region7: #{reverse.0} parent=4 // pred_check_branch
        %6 = sbr.rel (0) target = $region9
      $region8: #{reverse.0} parent=4 // pred_region
        // Predicated region
        $region21: #{reverse.0} parent=8 // pred_check
          _
        $region22: #{reverse.0} parent=8 // pred_check_branch
          %52 = sbr.rel (0) target = $region24
        $region23: #{reverse.0} parent=8 // pred_region
          loop: start=0, step=1, limit=1
          $region25: #{reverse.0} parent=23 // loop_pre_header
            _
          $region26: #{reverse.0} parent=23 // loop_header
            %s54 = sphi 0, %s58
            %p55 = scmp.ge.s32.totalorder %s54, 1
            %s59 = sphi %s0, %s0
            %s60 = sphi %s2, %s2
          $region27: #{reverse.0} parent=23 // loop_header_branch
            %57 = sbr.rel (%p55) target = $region31
          $region28: #{reverse.0} parent=23 // loop_body
            %v61 = vld [vmem:[%s59] sm:$0xff]
            %62 = vst [vmem:[%s60] sm:$0xff] %v61
            %v63 = vld [vmem:[%s59 + $0x8] sm:$0xff]
            %64 = vst [vmem:[%s60 + $0x10] sm:$0xff] %v63
            %v65 = vld [vmem:[%s59 + $0x10] sm:$0xff]
            %66 = vst [vmem:[%s60 + $0x20] sm:$0xff] %v65
            %v67 = vld [vmem:[%s59 + $0x18] sm:$0xff]
            %68 = vst [vmem:[%s60 + $0x30] sm:$0xff] %v67
            %v69 = vld [vmem:[%s59 + $0x20] sm:$0xff]
            %70 = vst [vmem:[%s60 + $0x40] sm:$0xff] %v69
            %v71 = vld [vmem:[%s59 + $0x28] sm:$0xff]
            %72 = vst [vmem:[%s60 + $0x50] sm:$0xff] %v71
            %v73 = vld [vmem:[%s59 + $0x30] sm:$0xff]
            %74 = vst [vmem:[%s60 + $0x60] sm:$0xff] %v73
            %v75 = vld [vmem:[%s59 + $0x38] sm:$0xff]
            %76 = vst [vmem:[%s60 + $0x70] sm:$0xff] %v75
            %v77 = vld [vmem:[%s59 + $0x40] sm:$0xff]
            %78 = vst [vmem:[%s60 + $0x80] sm:$0xff] %v77
            %v79 = vld [vmem:[%s59 + $0x48] sm:$0xff]
            %80 = vst [vmem:[%s60 + $0x90] sm:$0xff] %v79
            %v81 = vld [vmem:[%s59 + $0x50] sm:$0xff]
            %82 = vst [vmem:[%s60 + $0xa0] sm:$0xff] %v81
            %v83 = vld [vmem:[%s59 + $0x58] sm:$0xff]
            %84 = vst [vmem:[%s60 + $0xb0] sm:$0xff] %v83
            %v85 = vld [vmem:[%s59 + $0x60] sm:$0xff]
            %86 = vst [vmem:[%s60 + $0xc0] sm:$0xff] %v85
            %v87 = vld [vmem:[%s59 + $0x68] sm:$0xff]
            %88 = vst [vmem:[%s60 + $0xd0] sm:$0xff] %v87
            %v89 = vld [vmem:[%s59 + $0x70] sm:$0xff]
            %90 = vst [vmem:[%s60 + $0xe0] sm:$0xff] %v89
            %v91 = vld [vmem:[%s59 + $0x78] sm:$0xff]
            %92 = vst [vmem:[%s60 + $0xf0] sm:$0xff] %v91
          $region29: #{reverse.0} parent=23 // loop_footer
            %s58 = sadd.s32 1, %s54
          $region30: #{reverse.0} parent=23 // loop_footer_branch
            %53 = sbr.rel target = $region26
          $region31: #{reverse.0} parent=23 // loop_exit
            _
        $region24: #{reverse.0} parent=8 // pred_fallthru
          _
        // Predicated region
        $region32: #{reverse.0} parent=8 // pred_check
          _
        $region33: #{reverse.0} parent=8 // pred_check_branch
          %94 = sbr.rel target = $region35
        $region34: #{reverse.0} parent=8 // pred_region
          _
        $region35: #{reverse.0} parent=8 // pred_fallthru
          _
      $region9: #{reverse.0} parent=4 // pred_fallthru
        _
      // Predicated region
      $region10: #{reverse.0} parent=4 // pred_check
        _
      $region11: #{reverse.0} parent=4 // pred_check_branch
        %8 = sbr.rel target = $region13
      $region12: #{reverse.0} parent=4 // pred_region
        %s10 = ssub.s32 256, 1
        loop: start=0, step=1, limit=1
        $region14: #{reverse.0} parent=12 // loop_pre_header
          _
        $region15: #{reverse.0} parent=12 // loop_header
          %s12 = sphi 0, %s16
          %p13 = scmp.ge.s32.totalorder %s12, 1
          %s17 = sphi %s0, %s0
          %s18 = sphi %s2, %s2
        $region16: #{reverse.0} parent=12 // loop_header_branch
          %15 = sbr.rel (%p13) target = $region20
        $region17: #{reverse.0} parent=12 // loop_body
          %v19 = vld [vmem:[%s17] sm:%s10]
          %20 = vst [vmem:[%s18] sm:%s10] %v19
          %v21 = vld [vmem:[%s17 + $0x8] sm:%s10]
          %22 = vst [vmem:[%s18 + $0x10] sm:%s10] %v21
          %v23 = vld [vmem:[%s17 + $0x10] sm:%s10]
          %24 = vst [vmem:[%s18 + $0x20] sm:%s10] %v23
          %v25 = vld [vmem:[%s17 + $0x18] sm:%s10]
          %26 = vst [vmem:[%s18 + $0x30] sm:%s10] %v25
          %v27 = vld [vmem:[%s17 + $0x20] sm:%s10]
          %28 = vst [vmem:[%s18 + $0x40] sm:%s10] %v27
          %v29 = vld [vmem:[%s17 + $0x28] sm:%s10]
          %30 = vst [vmem:[%s18 + $0x50] sm:%s10] %v29
          %v31 = vld [vmem:[%s17 + $0x30] sm:%s10]
          %32 = vst [vmem:[%s18 + $0x60] sm:%s10] %v31
          %v33 = vld [vmem:[%s17 + $0x38] sm:%s10]
          %34 = vst [vmem:[%s18 + $0x70] sm:%s10] %v33
          %v35 = vld [vmem:[%s17 + $0x40] sm:%s10]
          %36 = vst [vmem:[%s18 + $0x80] sm:%s10] %v35
          %v37 = vld [vmem:[%s17 + $0x48] sm:%s10]
          %38 = vst [vmem:[%s18 + $0x90] sm:%s10] %v37
          %v39 = vld [vmem:[%s17 + $0x50] sm:%s10]
          %40 = vst [vmem:[%s18 + $0xa0] sm:%s10] %v39
          %v41 = vld [vmem:[%s17 + $0x58] sm:%s10]
          %42 = vst [vmem:[%s18 + $0xb0] sm:%s10] %v41
          %v43 = vld [vmem:[%s17 + $0x60] sm:%s10]
          %44 = vst [vmem:[%s18 + $0xc0] sm:%s10] %v43
          %v45 = vld [vmem:[%s17 + $0x68] sm:%s10]
          %46 = vst [vmem:[%s18 + $0xd0] sm:%s10] %v45
          %v47 = vld [vmem:[%s17 + $0x70] sm:%s10]
          %48 = vst [vmem:[%s18 + $0xe0] sm:%s10] %v47
          %v49 = vld [vmem:[%s17 + $0x78] sm:%s10]
          %50 = vst [vmem:[%s18 + $0xf0] sm:%s10] %v49
        $region18: #{reverse.0} parent=12 // loop_footer
          %s16 = sadd.s32 1, %s12
        $region19: #{reverse.0} parent=12 // loop_footer_branch
          %11 = sbr.rel target = $region15
        $region20: #{reverse.0} parent=12 // loop_exit
          _
      $region13: #{reverse.0} parent=4 // pred_fallthru
        _
    $region5: #{reverse.0} parent=1 // pred_fallthru
      _
    %95 = vnop
    %s96 = scalar_lea.vmem [#allocation0], 7
    %v97 = vld [vmem:[%s96] ss:$-1 sm:$0xff]
    %v98 = vrot.slane %v97, 1
    %99 = vst [vmem:[#allocation1] sm:$0xff] %v98
    %s100 = scalar_lea.vmem [#allocation0], 8
    %s101 = scalar_lea.vmem %s100, 7 [#allocation0]
    %v102 = vld [vmem:[%s101] ss:$-1 sm:$0xff]
    %v103 = vrot.slane %v102, 1
    %v104 = vlaneseq
    %v105 = vshrl.u32 %v104, 7
    %vm106 = vcmp.lt.s32.totalorder %v105, 7
    %107 = vst.msk [vmem:[#allocation1] sm:$0xff] %vm106, %v103
    %s108 = scalar_lea.vmem [#allocation1], 8
    %s109 = scalar_lea.vmem [#allocation0], 16
    %s110 = scalar_lea.vmem %s109, 7 [#allocation0]
    %v111 = vld [vmem:[%s110] ss:$-1 sm:$0xff]
    %v112 = vrot.slane %v111, 1
    %113 = vst [vmem:[%s108] sm:$0xff] %v112
    %s114 = scalar_lea.vmem %s109, 8 [#allocation0]
    %s115 = scalar_lea.vmem %s114, 7 [#allocation0]
    %v116 = vld [vmem:[%s115] ss:$-1 sm:$0xff]
    %v117 = vrot.slane %v116, 1
    %v118 = vlaneseq
    %v119 = vshrl.u32 %v118, 7
    %vm120 = vcmp.lt.s32.totalorder %v119, 7
    %121 = vst.msk [vmem:[%s108] sm:$0xff] %vm120, %v117
    %s122 = scalar_lea.vmem [#allocation1], 16
    %s123 = scalar_lea.vmem [#allocation0], 32
    %s124 = scalar_lea.vmem %s123, 7 [#allocation0]
    %v125 = vld [vmem:[%s124] ss:$-1 sm:$0xff]
    %v126 = vrot.slane %v125, 1
    %127 = vst [vmem:[%s122] sm:$0xff] %v126
    %s128 = scalar_lea.vmem %s123, 8 [#allocation0]
    %s129 = scalar_lea.vmem %s128, 7 [#allocation0]
    %v130 = vld [vmem:[%s129] ss:$-1 sm:$0xff]
    %v131 = vrot.slane %v130, 1
    %v132 = vlaneseq
    %v133 = vshrl.u32 %v132, 7
    %vm134 = vcmp.lt.s32.totalorder %v133, 7
    %135 = vst.msk [vmem:[%s122] sm:$0xff] %vm134, %v131
    %s136 = scalar_lea.vmem [#allocation1], 24
    %s137 = scalar_lea.vmem [#allocation0], 48
    %s138 = scalar_lea.vmem %s137, 7 [#allocation0]
    %v139 = vld [vmem:[%s138] ss:$-1 sm:$0xff]
    %v140 = vrot.slane %v139, 1
    %141 = vst [vmem:[%s136] sm:$0xff] %v140
    %s142 = scalar_lea.vmem %s137, 8 [#allocation0]
    %s143 = scalar_lea.vmem %s142, 7 [#allocation0]
    %v144 = vld [vmem:[%s143] ss:$-1 sm:$0xff]
    %v145 = vrot.slane %v144, 1
    %v146 = vlaneseq
    %v147 = vshrl.u32 %v146, 7
    %vm148 = vcmp.lt.s32.totalorder %v147, 7
    %149 = vst.msk [vmem:[%s136] sm:$0xff] %vm148, %v145
    %s150 = scalar_lea.vmem [#allocation1], 32
    %s151 = scalar_lea.vmem [#allocation0], 64
    %s152 = scalar_lea.vmem %s151, 7 [#allocation0]
    %v153 = vld [vmem:[%s152] ss:$-1 sm:$0xff]
    %v154 = vrot.slane %v153, 1
    %155 = vst [vmem:[%s150] sm:$0xff] %v154
    %s156 = scalar_lea.vmem %s151, 8 [#allocation0]
    %s157 = scalar_lea.vmem %s156, 7 [#allocation0]
    %v158 = vld [vmem:[%s157] ss:$-1 sm:$0xff]
    %v159 = vrot.slane %v158, 1
    %v160 = vlaneseq
    %v161 = vshrl.u32 %v160, 7
    %vm162 = vcmp.lt.s32.totalorder %v161, 7
    %163 = vst.msk [vmem:[%s150] sm:$0xff] %vm162, %v159
    %s164 = scalar_lea.vmem [#allocation1], 40
    %s165 = scalar_lea.vmem [#allocation0], 80
    %s166 = scalar_lea.vmem %s165, 7 [#allocation0]
    %v167 = vld [vmem:[%s166] ss:$-1 sm:$0xff]
    %v168 = vrot.slane %v167, 1
    %169 = vst [vmem:[%s164] sm:$0xff] %v168
    %s170 = scalar_lea.vmem %s165, 8 [#allocation0]
    %s171 = scalar_lea.vmem %s170, 7 [#allocation0]
    %v172 = vld [vmem:[%s171] ss:$-1 sm:$0xff]
    %v173 = vrot.slane %v172, 1
    %v174 = vlaneseq
    %v175 = vshrl.u32 %v174, 7
    %vm176 = vcmp.lt.s32.totalorder %v175, 7
    %177 = vst.msk [vmem:[%s164] sm:$0xff] %vm176, %v173
    %s178 = scalar_lea.vmem [#allocation1], 48
    %s179 = scalar_lea.vmem [#allocation0], 96
    %s180 = scalar_lea.vmem %s179, 7 [#allocation0]
    %v181 = vld [vmem:[%s180] ss:$-1 sm:$0xff]
    %v182 = vrot.slane %v181, 1
    %183 = vst [vmem:[%s178] sm:$0xff] %v182
    %s184 = scalar_lea.vmem %s179, 8 [#allocation0]
    %s185 = scalar_lea.vmem %s184, 7 [#allocation0]
    %v186 = vld [vmem:[%s185] ss:$-1 sm:$0xff]
    %v187 = vrot.slane %v186, 1
    %v188 = vlaneseq
    %v189 = vshrl.u32 %v188, 7
    %vm190 = vcmp.lt.s32.totalorder %v189, 7
    %191 = vst.msk [vmem:[%s178] sm:$0xff] %vm190, %v187
    %s192 = scalar_lea.vmem [#allocation1], 56
    %s193 = scalar_lea.vmem [#allocation0], 112
    %s194 = scalar_lea.vmem %s193, 7 [#allocation0]
    %v195 = vld [vmem:[%s194] ss:$-1 sm:$0xff]
    %v196 = vrot.slane %v195, 1
    %197 = vst [vmem:[%s192] sm:$0xff] %v196
    %s198 = scalar_lea.vmem %s193, 8 [#allocation0]
    %s199 = scalar_lea.vmem %s198, 7 [#allocation0]
    %v200 = vld [vmem:[%s199] ss:$-1 sm:$0xff]
    %v201 = vrot.slane %v200, 1
    %v202 = vlaneseq
    %v203 = vshrl.u32 %v202, 7
    %vm204 = vcmp.lt.s32.totalorder %v203, 7
    %205 = vst.msk [vmem:[%s192] sm:$0xff] %vm204, %v201
    %s206 = scalar_lea.vmem [#allocation1], 64
    %s207 = scalar_lea.vmem [#allocation0], 128
    %s208 = scalar_lea.vmem %s207, 7 [#allocation0]
    %v209 = vld [vmem:[%s208] ss:$-1 sm:$0xff]
    %v210 = vrot.slane %v209, 1
    %211 = vst [vmem:[%s206] sm:$0xff] %v210
    %s212 = scalar_lea.vmem %s207, 8 [#allocation0]
    %s213 = scalar_lea.vmem %s212, 7 [#allocation0]
    %v214 = vld [vmem:[%s213] ss:$-1 sm:$0xff]
    %v215 = vrot.slane %v214, 1
    %v216 = vlaneseq
    %v217 = vshrl.u32 %v216, 7
    %vm218 = vcmp.lt.s32.totalorder %v217, 7
    %219 = vst.msk [vmem:[%s206] sm:$0xff] %vm218, %v215
    %s220 = scalar_lea.vmem [#allocation1], 72
    %s221 = scalar_lea.vmem [#allocation0], 144
    %s222 = scalar_lea.vmem %s221, 7 [#allocation0]
    %v223 = vld [vmem:[%s222] ss:$-1 sm:$0xff]
    %v224 = vrot.slane %v223, 1
    %225 = vst [vmem:[%s220] sm:$0xff] %v224
    %s226 = scalar_lea.vmem %s221, 8 [#allocation0]
    %s227 = scalar_lea.vmem %s226, 7 [#allocation0]
    %v228 = vld [vmem:[%s227] ss:$-1 sm:$0xff]
    %v229 = vrot.slane %v228, 1
    %v230 = vlaneseq
    %v231 = vshrl.u32 %v230, 7
    %vm232 = vcmp.lt.s32.totalorder %v231, 7
    %233 = vst.msk [vmem:[%s220] sm:$0xff] %vm232, %v229
    %s234 = scalar_lea.vmem [#allocation1], 80
    %s235 = scalar_lea.vmem [#allocation0], 160
    %s236 = scalar_lea.vmem %s235, 7 [#allocation0]
    %v237 = vld [vmem:[%s236] ss:$-1 sm:$0xff]
    %v238 = vrot.slane %v237, 1
    %239 = vst [vmem:[%s234] sm:$0xff] %v238
    %s240 = scalar_lea.vmem %s235, 8 [#allocation0]
    %s241 = scalar_lea.vmem %s240, 7 [#allocation0]
    %v242 = vld [vmem:[%s241] ss:$-1 sm:$0xff]
    %v243 = vrot.slane %v242, 1
    %v244 = vlaneseq
    %v245 = vshrl.u32 %v244, 7
    %vm246 = vcmp.lt.s32.totalorder %v245, 7
    %247 = vst.msk [vmem:[%s234] sm:$0xff] %vm246, %v243
    %s248 = scalar_lea.vmem [#allocation1], 88
    %s249 = scalar_lea.vmem [#allocation0], 176
    %s250 = scalar_lea.vmem %s249, 7 [#allocation0]
    %v251 = vld [vmem:[%s250] ss:$-1 sm:$0xff]
    %v252 = vrot.slane %v251, 1
    %253 = vst [vmem:[%s248] sm:$0xff] %v252
    %s254 = scalar_lea.vmem %s249, 8 [#allocation0]
    %s255 = scalar_lea.vmem %s254, 7 [#allocation0]
    %v256 = vld [vmem:[%s255] ss:$-1 sm:$0xff]
    %v257 = vrot.slane %v256, 1
    %v258 = vlaneseq
    %v259 = vshrl.u32 %v258, 7
    %vm260 = vcmp.lt.s32.totalorder %v259, 7
    %261 = vst.msk [vmem:[%s248] sm:$0xff] %vm260, %v257
    %s262 = scalar_lea.vmem [#allocation1], 96
    %s263 = scalar_lea.vmem [#allocation0], 192
    %s264 = scalar_lea.vmem %s263, 7 [#allocation0]
    %v265 = vld [vmem:[%s264] ss:$-1 sm:$0xff]
    %v266 = vrot.slane %v265, 1
    %267 = vst [vmem:[%s262] sm:$0xff] %v266
    %s268 = scalar_lea.vmem %s263, 8 [#allocation0]
    %s269 = scalar_lea.vmem %s268, 7 [#allocation0]
    %v270 = vld [vmem:[%s269] ss:$-1 sm:$0xff]
    %v271 = vrot.slane %v270, 1
    %v272 = vlaneseq
    %v273 = vshrl.u32 %v272, 7
    %vm274 = vcmp.lt.s32.totalorder %v273, 7
    %275 = vst.msk [vmem:[%s262] sm:$0xff] %vm274, %v271
    %s276 = scalar_lea.vmem [#allocation1], 104
    %s277 = scalar_lea.vmem [#allocation0], 208
    %s278 = scalar_lea.vmem %s277, 7 [#allocation0]
    %v279 = vld [vmem:[%s278] ss:$-1 sm:$0xff]
    %v280 = vrot.slane %v279, 1
    %281 = vst [vmem:[%s276] sm:$0xff] %v280
    %s282 = scalar_lea.vmem %s277, 8 [#allocation0]
    %s283 = scalar_lea.vmem %s282, 7 [#allocation0]
    %v284 = vld [vmem:[%s283] ss:$-1 sm:$0xff]
    %v285 = vrot.slane %v284, 1
    %v286 = vlaneseq
    %v287 = vshrl.u32 %v286, 7
    %vm288 = vcmp.lt.s32.totalorder %v287, 7
    %289 = vst.msk [vmem:[%s276] sm:$0xff] %vm288, %v285
    %s290 = scalar_lea.vmem [#allocation1], 112
    %s291 = scalar_lea.vmem [#allocation0], 224
    %s292 = scalar_lea.vmem %s291, 7 [#allocation0]
    %v293 = vld [vmem:[%s292] ss:$-1 sm:$0xff]
    %v294 = vrot.slane %v293, 1
    %295 = vst [vmem:[%s290] sm:$0xff] %v294
    %s296 = scalar_lea.vmem %s291, 8 [#allocation0]
    %s297 = scalar_lea.vmem %s296, 7 [#allocation0]
    %v298 = vld [vmem:[%s297] ss:$-1 sm:$0xff]
    %v299 = vrot.slane %v298, 1
    %v300 = vlaneseq
    %v301 = vshrl.u32 %v300, 7
    %vm302 = vcmp.lt.s32.totalorder %v301, 7
    %303 = vst.msk [vmem:[%s290] sm:$0xff] %vm302, %v299
    %s304 = scalar_lea.vmem [#allocation1], 120
    %s305 = scalar_lea.vmem [#allocation0], 240
    %s306 = scalar_lea.vmem %s305, 7 [#allocation0]
    %v307 = vld [vmem:[%s306] ss:$-1 sm:$0xff]
    %v308 = vrot.slane %v307, 1
    %309 = vst [vmem:[%s304] sm:$0xff] %v308
    %s310 = scalar_lea.vmem %s305, 8 [#allocation0]
    %s311 = scalar_lea.vmem %s310, 7 [#allocation0]
    %v312 = vld [vmem:[%s311] ss:$-1 sm:$0xff]
    %v313 = vrot.slane %v312, 1
    %v314 = vlaneseq
    %v315 = vshrl.u32 %v314, 7
    %vm316 = vcmp.lt.s32.totalorder %v315, 7
    %317 = vst.msk [vmem:[%s304] sm:$0xff] %vm316, %v313
    // Predicated region
    $region36: #{reverse.0} parent=1 // pred_check
      _
    $region37: #{reverse.0} parent=1 // pred_check_branch
      %319 = sbr.rel (0) target = $region39
    $region38: #{reverse.0} parent=1 // pred_region
      // Predicated region
      $region40: #{reverse.0} parent=38 // pred_check
        _
      $region41: #{reverse.0} parent=38 // pred_check_branch
        %321 = sbr.rel (0) target = $region43
      $region42: #{reverse.0} parent=38 // pred_region
        // Predicated region
        $region55: #{reverse.0} parent=42 // pred_check
          _
        $region56: #{reverse.0} parent=42 // pred_check_branch
          %367 = sbr.rel (0) target = $region58
        $region57: #{reverse.0} parent=42 // pred_region
          loop: start=0, step=1, limit=1
          $region59: #{reverse.0} parent=57 // loop_pre_header
            _
          $region60: #{reverse.0} parent=57 // loop_header
            %s369 = sphi 0, %s373
            %p370 = scmp.ge.s32.totalorder %s369, 1
            %s374 = sphi [#allocation1], [#allocation1]
            %s375 = sphi %s1, %s1
          $region61: #{reverse.0} parent=57 // loop_header_branch
            %372 = sbr.rel (%p370) target = $region65
          $region62: #{reverse.0} parent=57 // loop_body
            %v376 = vld [vmem:[%s374] sm:$0xff]
            %377 = vst [vmem:[%s375] sm:$0xff] %v376
            %v378 = vld [vmem:[%s374 + $0x8] sm:$0xff]
            %379 = vst [vmem:[%s375 + $0x8] sm:$0xff] %v378
            %v380 = vld [vmem:[%s374 + $0x10] sm:$0xff]
            %381 = vst [vmem:[%s375 + $0x10] sm:$0xff] %v380
            %v382 = vld [vmem:[%s374 + $0x18] sm:$0xff]
            %383 = vst [vmem:[%s375 + $0x18] sm:$0xff] %v382
            %v384 = vld [vmem:[%s374 + $0x20] sm:$0xff]
            %385 = vst [vmem:[%s375 + $0x20] sm:$0xff] %v384
            %v386 = vld [vmem:[%s374 + $0x28] sm:$0xff]
            %387 = vst [vmem:[%s375 + $0x28] sm:$0xff] %v386
            %v388 = vld [vmem:[%s374 + $0x30] sm:$0xff]
            %389 = vst [vmem:[%s375 + $0x30] sm:$0xff] %v388
            %v390 = vld [vmem:[%s374 + $0x38] sm:$0xff]
            %391 = vst [vmem:[%s375 + $0x38] sm:$0xff] %v390
            %v392 = vld [vmem:[%s374 + $0x40] sm:$0xff]
            %393 = vst [vmem:[%s375 + $0x40] sm:$0xff] %v392
            %v394 = vld [vmem:[%s374 + $0x48] sm:$0xff]
            %395 = vst [vmem:[%s375 + $0x48] sm:$0xff] %v394
            %v396 = vld [vmem:[%s374 + $0x50] sm:$0xff]
            %397 = vst [vmem:[%s375 + $0x50] sm:$0xff] %v396
            %v398 = vld [vmem:[%s374 + $0x58] sm:$0xff]
            %399 = vst [vmem:[%s375 + $0x58] sm:$0xff] %v398
            %v400 = vld [vmem:[%s374 + $0x60] sm:$0xff]
            %401 = vst [vmem:[%s375 + $0x60] sm:$0xff] %v400
            %v402 = vld [vmem:[%s374 + $0x68] sm:$0xff]
            %403 = vst [vmem:[%s375 + $0x68] sm:$0xff] %v402
            %v404 = vld [vmem:[%s374 + $0x70] sm:$0xff]
            %405 = vst [vmem:[%s375 + $0x70] sm:$0xff] %v404
            %v406 = vld [vmem:[%s374 + $0x78] sm:$0xff]
            %407 = vst [vmem:[%s375 + $0x78] sm:$0xff] %v406
          $region63: #{reverse.0} parent=57 // loop_footer
            %s373 = sadd.s32 1, %s369
          $region64: #{reverse.0} parent=57 // loop_footer_branch
            %368 = sbr.rel target = $region60
          $region65: #{reverse.0} parent=57 // loop_exit
            _
        $region58: #{reverse.0} parent=42 // pred_fallthru
          _
        // Predicated region
        $region66: #{reverse.0} parent=42 // pred_check
          _
        $region67: #{reverse.0} parent=42 // pred_check_branch
          %409 = sbr.rel target = $region69
        $region68: #{reverse.0} parent=42 // pred_region
          _
        $region69: #{reverse.0} parent=42 // pred_fallthru
          _
      $region43: #{reverse.0} parent=38 // pred_fallthru
        _
      // Predicated region
      $region44: #{reverse.0} parent=38 // pred_check
        _
      $region45: #{reverse.0} parent=38 // pred_check_branch
        %323 = sbr.rel target = $region47
      $region46: #{reverse.0} parent=38 // pred_region
        %s325 = ssub.s32 256, 1
        loop: start=0, step=1, limit=1
        $region48: #{reverse.0} parent=46 // loop_pre_header
          _
        $region49: #{reverse.0} parent=46 // loop_header
          %s327 = sphi 0, %s331
          %p328 = scmp.ge.s32.totalorder %s327, 1
          %s332 = sphi [#allocation1], [#allocation1]
          %s333 = sphi %s1, %s1
        $region50: #{reverse.0} parent=46 // loop_header_branch
          %330 = sbr.rel (%p328) target = $region54
        $region51: #{reverse.0} parent=46 // loop_body
          %v334 = vld [vmem:[%s332] sm:%s325]
          %335 = vst [vmem:[%s333] sm:%s325] %v334
          %v336 = vld [vmem:[%s332 + $0x8] sm:%s325]
          %337 = vst [vmem:[%s333 + $0x8] sm:%s325] %v336
          %v338 = vld [vmem:[%s332 + $0x10] sm:%s325]
          %339 = vst [vmem:[%s333 + $0x10] sm:%s325] %v338
          %v340 = vld [vmem:[%s332 + $0x18] sm:%s325]
          %341 = vst [vmem:[%s333 + $0x18] sm:%s325] %v340
          %v342 = vld [vmem:[%s332 + $0x20] sm:%s325]
          %343 = vst [vmem:[%s333 + $0x20] sm:%s325] %v342
          %v344 = vld [vmem:[%s332 + $0x28] sm:%s325]
          %345 = vst [vmem:[%s333 + $0x28] sm:%s325] %v344
          %v346 = vld [vmem:[%s332 + $0x30] sm:%s325]
          %347 = vst [vmem:[%s333 + $0x30] sm:%s325] %v346
          %v348 = vld [vmem:[%s332 + $0x38] sm:%s325]
          %349 = vst [vmem:[%s333 + $0x38] sm:%s325] %v348
          %v350 = vld [vmem:[%s332 + $0x40] sm:%s325]
          %351 = vst [vmem:[%s333 + $0x40] sm:%s325] %v350
          %v352 = vld [vmem:[%s332 + $0x48] sm:%s325]
          %353 = vst [vmem:[%s333 + $0x48] sm:%s325] %v352
          %v354 = vld [vmem:[%s332 + $0x50] sm:%s325]
          %355 = vst [vmem:[%s333 + $0x50] sm:%s325] %v354
          %v356 = vld [vmem:[%s332 + $0x58] sm:%s325]
          %357 = vst [vmem:[%s333 + $0x58] sm:%s325] %v356
          %v358 = vld [vmem:[%s332 + $0x60] sm:%s325]
          %359 = vst [vmem:[%s333 + $0x60] sm:%s325] %v358
          %v360 = vld [vmem:[%s332 + $0x68] sm:%s325]
          %361 = vst [vmem:[%s333 + $0x68] sm:%s325] %v360
          %v362 = vld [vmem:[%s332 + $0x70] sm:%s325]
          %363 = vst [vmem:[%s333 + $0x70] sm:%s325] %v362
          %v364 = vld [vmem:[%s332 + $0x78] sm:%s325]
          %365 = vst [vmem:[%s333 + $0x78] sm:%s325] %v364
        $region52: #{reverse.0} parent=46 // loop_footer
          %s331 = sadd.s32 1, %s327
        $region53: #{reverse.0} parent=46 // loop_footer_branch
          %326 = sbr.rel target = $region49
        $region54: #{reverse.0} parent=46 // loop_exit
          _
      $region47: #{reverse.0} parent=38 // pred_fallthru
        _
    $region39: #{reverse.0} parent=1 // pred_fallthru
      _
    %410 = vnop

// kernel: _lambda_.3
$region0: #{_lambda_.3}
  #allocation0 [shape = 'u32[]', space=smem, size = 0x4, offset = 0x4, fixed_abs, tag = 'smem constant byte address 0x4 - core index']
  #allocation1 [shape = 'u32[144,128]{1,0:T(1,128)}', space=vmem, size = 0x12000, scoped, tag = 'internal scratch']
  %s0 = inlined_call_operand.vmem [shape: f32[2,8,256], index: 0, kind: input, shape index: {}]
  %s1 = inlined_call_operand.vmem [shape: f32[8,8], index: 1, kind: input, shape index: {}]
  %s2 = inlined_call_operand.vmem [shape: f32[8,1], index: 2, kind: input, shape index: {}]
  %s3 = inlined_call_operand.vmem [shape: f32[2,8,256], index: 3, kind: input, shape index: {}, may-alias: {3,4}]
  %s4 = inlined_call_operand.vmem [shape: f32[2,8,256], index: 4, kind: output, shape index: {}, may-alias: {3,4}]
  %s5 = sld [smem:[#allocation0]]
  $region26: #{_lambda_.3} parent=0
    _
  %s7 = ssub.s32 1, %s5
  %s8 = scalar_select 0, %s7, %s5
  // Predicated region
  $region2: #{_lambda_.3} parent=0 // pred_check
    _
  $region3: #{_lambda_.3} parent=0 // pred_check_branch
    %10 = sbr.rel (0) target = $region5
  $region4: #{_lambda_.3} parent=0 // pred_region
    _
  $region5: #{_lambda_.3} parent=0 // pred_fallthru
    _
  // Predicated region
  $region6: #{_lambda_.3} parent=0 // pred_check
    _
  $region7: #{_lambda_.3} parent=0 // pred_check_branch
    %12 = sbr.rel (0) target = $region9
  $region8: #{_lambda_.3} parent=0 // pred_region
    _
  $region9: #{_lambda_.3} parent=0 // pred_fallthru
    _
  // Predicated region
  $region10: #{_lambda_.3} parent=0 // pred_check
    _
  $region11: #{_lambda_.3} parent=0 // pred_check_branch
    %14 = sbr.rel (0) target = $region13
  $region12: #{_lambda_.3} parent=0 // pred_region
    _
  $region13: #{_lambda_.3} parent=0 // pred_fallthru
    _
  // Predicated region
  $region14: #{_lambda_.3} parent=0 // pred_check
    _
  $region15: #{_lambda_.3} parent=0 // pred_check_branch
    %16 = sbr.rel (0) target = $region17
  $region16: #{_lambda_.3} parent=0 // pred_region
    _
  $region17: #{_lambda_.3} parent=0 // pred_fallthru
    _
  %v17 = vld [vmem:[%s1] sm:$0xff]
  %v18 = vld [vmem:[%s2] sm:$0xff]
  %v19 = vld [vmem:[%s0] sm:$0xff]
  %v20 = vld [vmem:[%s0 + $0x8] sm:$0xff]
  %22 = vset.pattern.permute.xlu0 0
  %23 = vperm.xlu0 %22, %v18
  %v24 = vpop.permute.xlu0 %23
  %vm26 = vcmask 64512
  %v28 = vsel %vm26, %v17, 0
  %30 = vmatprep.subr.mxu0 0.0
  %31 = vmatpush1.msra.mxu0 0.0
  %32 = vmatprep.subr.mxu0 0.0
  %33 = vmatpush1.msra.mxu0 0.0
  %34 = vmatprep.subr.mxu0 0.0
  %35 = vmatpush1.msra.mxu0 0.0
  %36 = vmatprep.subr.mxu0 0.0
  %37 = vmatpush1.msra.mxu0 0.0
  %38 = vmatprep.subr.mxu0 0.0
  %39 = vmatpush1.msra.mxu0 0.0
  %40 = vmatprep.subr.mxu0 0.0
  %41 = vmatpush1.msra.mxu0 0.0
  %42 = vmatprep.subr.mxu0 0.0
  %43 = vmatpush1.msra.mxu0 0.0
  %44 = vmatprep.subr.mxu0 0.0
  %45 = vmatpush1.msra.mxu0 0.0
  %46 = vmatprep.subr.mxu0 0.0
  %47 = vmatpush1.msra.mxu0 0.0
  %48 = vmatprep.subr.mxu0 0.0
  %49 = vmatpush1.msra.mxu0 0.0
  %50 = vmatprep.subr.mxu0 0.0
  %51 = vmatpush1.msra.mxu0 0.0
  %52 = vmatprep.subr.mxu0 0.0
  %53 = vmatpush1.msra.mxu0 0.0
  %54 = vmatprep.subr.mxu0 0.0
  %55 = vmatpush1.msra.mxu0 0.0
  %56 = vmatprep.subr.mxu0 0.0
  %57 = vmatpush1.msra.mxu0 0.0
  %58 = vmatprep.subr.mxu0 0.0
  %59 = vmatpush1.msra.mxu0 0.0
  %60 = vmatprep.subr.mxu0 %v20
  %61 = vmatpush1.msra.mxu0 %v19
  %62 = vmatprep.subr.mxu0 0.0
  %63 = vmatpush2.msra.mxu0 0.0
  %64 = vmatprep.subr.mxu0 0.0
  %65 = vmatpush2.msra.mxu0 0.0
  %66 = vmatprep.subr.mxu0 0.0
  %67 = vmatpush2.msra.mxu0 0.0
  %68 = vmatprep.subr.mxu0 0.0
  %69 = vmatpush2.msra.mxu0 0.0
  %70 = vmatprep.subr.mxu0 0.0
  %71 = vmatpush2.msra.mxu0 0.0
  %72 = vmatprep.subr.mxu0 0.0
  %73 = vmatpush2.msra.mxu0 0.0
  %74 = vmatprep.subr.mxu0 0.0
  %75 = vmatpush2.msra.mxu0 0.0
  %76 = vmatprep.subr.mxu0 0.0
  %77 = vmatpush2.msra.mxu0 0.0
  %78 = vmatprep.subr.mxu0 0.0
  %79 = vmatpush2.msra.mxu0 0.0
  %80 = vmatprep.subr.mxu0 0.0
  %81 = vmatpush2.msra.mxu0 0.0
  %82 = vmatprep.subr.mxu0 0.0
  %83 = vmatpush2.msra.mxu0 0.0
  %84 = vmatprep.subr.mxu0 0.0
  %85 = vmatpush2.msra.mxu0 0.0
  %86 = vmatprep.subr.mxu0 0.0
  %87 = vmatpush2.msra.mxu0 0.0
  %88 = vmatprep.subr.mxu0 0.0
  %89 = vmatpush2.msra.mxu0 0.0
  %90 = vmatprep.subr.mxu0 0.0
  %91 = vmatpush2.msra.mxu0 0.0
  %92 = vmatprep.subr.mxu0 0.0
  %93 = vmatpush2.msra.mxu0 0.0
  %94 = vmatprep.mubr.f32.mxu0 0.0
  %95 = vmatmul.mubr.f32.gmra.mxu0 %v28
  %v96 = vpop.f32.mrf.mxu0
  %v97 = vadd.f32 %v24, %v96
  %v98 = vpop.f32.mrf.mxu0
  %v99 = vadd.f32 %v24, %v98
  %100 = vdwg.mxu0
  %v101 = vld [vmem:[%s3] sm:$0xff]
  %v102 = vld [vmem:[%s3 + $0x8] sm:$0xff]
  %v103 = vadd.f32 %v97, %v101
  %v104 = vadd.f32 %v99, %v102
  %105 = vst [vmem:[%s4] sm:$0xff] %v103
  %106 = vst [vmem:[%s4 + $0x8] sm:$0xff] %v104
  %s107 = scalar_lea.vmem %s0, 16
  %v108 = vld [vmem:[%s107] sm:$0xff]
  %v109 = vld [vmem:[%s107 + $0x8] sm:$0xff]
  %110 = vmatprep.subr.mxu0 0.0
  %111 = vmatpush1.msra.mxu0 0.0
  %112 = vmatprep.subr.mxu0 0.0
  %113 = vmatpush1.msra.mxu0 0.0
  %114 = vmatprep.subr.mxu0 0.0
  %115 = vmatpush1.msra.mxu0 0.0
  %116 = vmatprep.subr.mxu0 0.0
  %117 = vmatpush1.msra.mxu0 0.0
  %118 = vmatprep.subr.mxu0 0.0
  %119 = vmatpush1.msra.mxu0 0.0
  %120 = vmatprep.subr.mxu0 0.0
  %121 = vmatpush1.msra.mxu0 0.0
  %122 = vmatprep.subr.mxu0 0.0
  %123 = vmatpush1.msra.mxu0 0.0
  %124 = vmatprep.subr.mxu0 0.0
  %125 = vmatpush1.msra.mxu0 0.0
  %126 = vmatprep.subr.mxu0 0.0
  %127 = vmatpush1.msra.mxu0 0.0
  %128 = vmatprep.subr.mxu0 0.0
  %129 = vmatpush1.msra.mxu0 0.0
  %130 = vmatprep.subr.mxu0 0.0
  %131 = vmatpush1.msra.mxu0 0.0
  %132 = vmatprep.subr.mxu0 0.0
  %133 = vmatpush1.msra.mxu0 0.0
  %134 = vmatprep.subr.mxu0 0.0
  %135 = vmatpush1.msra.mxu0 0.0
  %136 = vmatprep.subr.mxu0 0.0
  %137 = vmatpush1.msra.mxu0 0.0
  %138 = vmatprep.subr.mxu0 0.0
  %139 = vmatpush1.msra.mxu0 0.0
  %140 = vmatprep.subr.mxu0 %v109
  %141 = vmatpush1.msra.mxu0 %v108
  %142 = vmatprep.subr.mxu0 0.0
  %143 = vmatpush2.msra.mxu0 0.0
  %144 = vmatprep.subr.mxu0 0.0
  %145 = vmatpush2.msra.mxu0 0.0
  %146 = vmatprep.subr.mxu0 0.0
  %147 = vmatpush2.msra.mxu0 0.0
  %148 = vmatprep.subr.mxu0 0.0
  %149 = vmatpush2.msra.mxu0 0.0
  %150 = vmatprep.subr.mxu0 0.0
  %151 = vmatpush2.msra.mxu0 0.0
  %152 = vmatprep.subr.mxu0 0.0
  %153 = vmatpush2.msra.mxu0 0.0
  %154 = vmatprep.subr.mxu0 0.0
  %155 = vmatpush2.msra.mxu0 0.0
  %156 = vmatprep.subr.mxu0 0.0
  %157 = vmatpush2.msra.mxu0 0.0
  %158 = vmatprep.subr.mxu0 0.0
  %159 = vmatpush2.msra.mxu0 0.0
  %160 = vmatprep.subr.mxu0 0.0
  %161 = vmatpush2.msra.mxu0 0.0
  %162 = vmatprep.subr.mxu0 0.0
  %163 = vmatpush2.msra.mxu0 0.0
  %164 = vmatprep.subr.mxu0 0.0
  %165 = vmatpush2.msra.mxu0 0.0
  %166 = vmatprep.subr.mxu0 0.0
  %167 = vmatpush2.msra.mxu0 0.0
  %168 = vmatprep.subr.mxu0 0.0
  %169 = vmatpush2.msra.mxu0 0.0
  %170 = vmatprep.subr.mxu0 0.0
  %171 = vmatpush2.msra.mxu0 0.0
  %172 = vmatprep.subr.mxu0 0.0
  %173 = vmatpush2.msra.mxu0 0.0
  %174 = vmatprep.mubr.f32.mxu0 0.0
  %175 = vmatmul.mubr.f32.gmra.mxu0 %v28
  %v176 = vpop.f32.mrf.mxu0
  %v177 = vadd.f32 %v24, %v176
  %v178 = vpop.f32.mrf.mxu0
  %v179 = vadd.f32 %v24, %v178
  %180 = vdwg.mxu0
  %s181 = scalar_lea.vmem %s3, 16
  %v182 = vld [vmem:[%s181] sm:$0xff]
  %v183 = vld [vmem:[%s181 + $0x8] sm:$0xff]
  %v184 = vadd.f32 %v177, %v182
  %v185 = vadd.f32 %v179, %v183
  %s186 = scalar_lea.vmem %s4, 16
  %187 = vst [vmem:[%s186] sm:$0xff] %v184
  %188 = vst [vmem:[%s186 + $0x8] sm:$0xff] %v185
  // Predicated region
  $region18: #{_lambda_.3} parent=0 // pred_check
    _
  $region19: #{_lambda_.3} parent=0 // pred_check_branch
    %190 = sbr.rel (0) target = $region21
  $region20: #{_lambda_.3} parent=0 // pred_region
    _
  $region21: #{_lambda_.3} parent=0 // pred_fallthru
    _
  // Predicated region
  $region22: #{_lambda_.3} parent=0 // pred_check
    _
  $region23: #{_lambda_.3} parent=0 // pred_check_branch
    %192 = sbr.rel (0) target = $region25
  $region24: #{_lambda_.3} parent=0 // pred_region
    _
  $region25: #{_lambda_.3} parent=0 // pred_fallthru
    _

</llo_original>
